<compile_context>
chip_gen: v5e
topology: v5e:2x2
jax: 0.10.0
libtpu: 0.0.40
codegen_flags: <defaults>
</compile_context>

<pallas_src>
import jax
import jax.numpy as jnp
from jax.experimental import pallas as pl
from jax.experimental.pallas import tpu as pltpu

# hyper-params (emb_dim must equal hid_dim for the module's prediction head to type-check)
VOCAB    = 128
EMB_DIM  = 32
HID_DIM  = 32
N_LAYERS = 2
BATCH    = 2
SEQ_LEN  = 8
LN_EPS   = 1e-5

H = HID_DIM
L = N_LAYERS
T = SEQ_LEN
B = BATCH
V = VOCAB
G = 4 * HID_DIM                      # gate width
SLAB_W = max(G, V)                   # common lane width of the packed parameter slab

# packed-parameter slab row offsets (each section padded to a multiple of 8 sublanes)
GX_OFF   = 0                          # (V, G)   emb_table @ W_ih[0] + b[0]
WHH0_OFF = GX_OFF + V                 # (H, G)   W_hh[0]
WCAT_OFF = WHH0_OFF + H               # (L-1)*(2H, G)  [W_ih[l]; W_hh[l]]
BU_OFF   = WCAT_OFF + (L - 1) * 2 * H # (L-1)*(8, G)   b[l] (row 0 valid)
WP_OFF   = BU_OFF + (L - 1) * 8       # (H, V)   gamma-folded prediction weight
BP_OFF   = WP_OFF + H                 # (8, V)   beta/bias-folded prediction bias (row 0 valid)
SLAB_ROWS = BP_OFF + 8


def _lstm_dec_kernel(tok_ref, state_ref, slab_ref, out_ref):
    f32 = jnp.float32

    # ---- one-time loads; everything stays in vregs afterwards ----
    st = state_ref[...]                                        # (2*L*B, H)
    h = [st[l * B:(l + 1) * B, :] for l in range(L)]
    c = [st[(L + l) * B:(L + l + 1) * B, :] for l in range(L)]

    whh0 = slab_ref[WHH0_OFF:WHH0_OFF + H, :][:, :G]           # (H, 4H)
    wcat = [slab_ref[WCAT_OFF + (l - 1) * 2 * H:WCAT_OFF + l * 2 * H, :][:, :G]
            for l in range(1, L)]                              # (2H, 4H) per upper layer
    # bias broadcasts hoisted (JAX does not CSE broadcast_in_dim inside the unrolled loop)
    b_up = [jnp.broadcast_to(
                slab_ref[BU_OFF + (l - 1) * 8:BU_OFF + (l - 1) * 8 + 1, :][:, :G], (B, G))
            for l in range(1, L)]
    wp = slab_ref[WP_OFF:WP_OFF + H, :][:, :V]                 # LayerNorm gamma folded in
    bp = slab_ref[BP_OFF:BP_OFF + 1, :][:, :V]                 # LayerNorm beta folded in

    # ---- in-kernel embedding gather: token -> precomputed layer-0 gate pre-activation ----
    gx = []                                                    # gx[t]: (B, 4H) = emb(tok)@W_ih0 + b0
    for t in range(T):
        rows = [slab_ref[pl.ds(tok_ref[t * B + b], 1), :] for b in range(B)]
        gx.append(jnp.concatenate(rows, axis=0)[:, :G])

    def lstm_cell(gates, c_prev):                              # PyTorch gate order: i, f, g, o
        i_g = jax.nn.sigmoid(gates[:, 0 * H:1 * H])
        f_g = jax.nn.sigmoid(gates[:, 1 * H:2 * H])
        g_g = jnp.tanh(gates[:, 2 * H:3 * H])
        o_g = jax.nn.sigmoid(gates[:, 3 * H:4 * H])
        c_new = f_g * c_prev + i_g * g_g
        h_new = o_g * jnp.tanh(c_new)
        return h_new, c_new

    # ---- wavefront recurrence: at wave s, layer l processes step t = s - l ----
    # All layer updates within a wave read only pre-wave state, so their matmuls are
    # data-independent and pipeline on the MXU (serial chains: T+L-1 instead of T*L).
    tops = [None] * T                                          # top-layer h per step
    for s in range(T + L - 1):
        h_prev = list(h)
        c_prev = list(c)
        for l in range(L):
            t = s - l
            if 0 <= t < T:
                if l == 0:
                    gates = gx[t] + jnp.dot(h_prev[0], whh0,
                                            preferred_element_type=f32)
                else:
                    lhs = jnp.concatenate([h_prev[l - 1], h_prev[l]], axis=1)   # (B, 2H)
                    gates = (jnp.dot(lhs, wcat[l - 1], preferred_element_type=f32)
                             + b_up[l - 1])
                h[l], c[l] = lstm_cell(gates, c_prev[l])
                if l == L - 1:
                    tops[t] = h[l]

    # ---- batch-major staging (row = b*T + t) folds the output transpose into the kernel ----
    h_all = jnp.concatenate(
        [tops[t][b:b + 1, :] for b in range(B) for t in range(T)], axis=0)      # (B*T, H)

    # ---- prediction head: LayerNorm (affine folded into wp/bp) -> Linear -> Softmax ----
    mu = jnp.mean(h_all, axis=-1, keepdims=True)
    var = jnp.mean((h_all - mu) ** 2, axis=-1, keepdims=True)
    y = (h_all - mu) * jax.lax.rsqrt(var + LN_EPS)
    logits = jnp.dot(y, wp, preferred_element_type=f32) + bp                    # (B*T, V)
    m = jnp.max(logits, axis=-1, keepdims=True)
    e = jnp.exp(logits - m)
    out_ref[...] = e / jnp.sum(e, axis=-1, keepdims=True)      # exact divide: rows sum to 1


def _pack_params(params):
    """Fold embedding / LayerNorm affine / biases and pack into one lane-dense f32 slab."""
    def pad_to(a, rows=None, width=SLAB_W):
        a = jnp.pad(a, ((0, 0), (0, width - a.shape[1])))
        if rows is not None:
            a = jnp.pad(a, ((0, rows - a.shape[0]), (0, 0)))
        return a

    pieces = []
    # take(E, tok) @ W == take(E @ W, tok): fold the layer-0 input projection into the table.
    gx_table = params["emb_table"] @ params["w_ih"][0] + params["b"][0][None, :]   # (V, 4H)
    pieces.append(pad_to(gx_table))
    pieces.append(pad_to(params["w_hh"][0]))
    for l in range(1, N_LAYERS):
        pieces.append(pad_to(jnp.concatenate([params["w_ih"][l], params["w_hh"][l]], axis=0)))
    for l in range(1, N_LAYERS):
        pieces.append(pad_to(params["b"][l][None, :], rows=8))
    wp_eff = params["w_pred"] * params["gamma"][0][:, None]                        # gamma fold
    pieces.append(pad_to(wp_eff))
    bp_eff = (params["beta"][0] @ params["w_pred"] + params["b_pred"][0])[None, :]  # beta fold
    pieces.append(pad_to(bp_eff, rows=8))
    slab = jnp.concatenate(pieces, axis=0).astype(jnp.float32)
    assert slab.shape == (SLAB_ROWS, SLAB_W), slab.shape
    return slab


def lstm_dec_forward(params, hidden, cell, tokens):
    """Teacher-forcing branch of LSTM_Dec.forward (output tokens provided)."""
    assert EMB_DIM == HID_DIM, "prediction head (LayerNorm(E) on H-dim LSTM output) needs E == H"
    slab = _pack_params(params)                                            # (272, 128) one DMA
    state = jnp.concatenate([hidden.reshape(L * B, H), cell.reshape(L * B, H)],
                            axis=0).astype(jnp.float32)                    # (8, 32)  one DMA
    tok_flat = jnp.transpose(tokens, (1, 0)).reshape(T * B).astype(jnp.int32)  # time-major, SMEM

    out_flat = pl.pallas_call(
        _lstm_dec_kernel,
        out_shape=jax.ShapeDtypeStruct((B * T, V), jnp.float32),
        grid_spec=pltpu.PrefetchScalarGridSpec(
            num_scalar_prefetch=1,            # tokens -> SMEM, gathered in-kernel
            grid=(1,),                        # single invocation; recurrence unrolled in-kernel
            in_specs=[
                pl.BlockSpec((2 * L * B, H), lambda i, tok: (0, 0)),        # packed (h0, c0)
                pl.BlockSpec((SLAB_ROWS, SLAB_W), lambda i, tok: (0, 0)),   # packed parameters
            ],
            out_specs=pl.BlockSpec((B * T, V), lambda i, tok: (0, 0)),
        ),
        compiler_params=pltpu.CompilerParams(dimension_semantics=("arbitrary",)),
    )(tok_flat, state, slab)

    return out_flat.reshape(B, T, V)          # rows already batch-major -> reshape is free


def ref_forward(params, hidden, cell, tokens):
    """Pure-JAX reference for correctness checking (no folding, no fusion)."""
    x = jnp.take(params["emb_table"], tokens, axis=0)   # (B, T, E)
    h, c = hidden, cell
    outs = []
    for t in range(SEQ_LEN):
        inp = x[:, t, :]
        h_new, c_new = [], []
        for l in range(N_LAYERS):
            gates = inp @ params["w_ih"][l] + h[l] @ params["w_hh"][l] + params["b"][l]
            i_g = jax.nn.sigmoid(gates[:, 0 * H:1 * H])
            f_g = jax.nn.sigmoid(gates[:, 1 * H:2 * H])
            g_g = jnp.tanh(gates[:, 2 * H:3 * H])
            o_g = jax.nn.sigmoid(gates[:, 3 * H:4 * H])
            cl = f_g * c[l] + i_g * g_g
            hl = o_g * jnp.tanh(cl)
            h_new.append(hl); c_new.append(cl)
            inp = hl
        h, c = jnp.stack(h_new), jnp.stack(c_new)
        outs.append(inp)
    out = jnp.stack(outs, axis=1)                        # (B, T, H)
    mu = out.mean(-1, keepdims=True)
    var = ((out - mu) ** 2).mean(-1, keepdims=True)
    y = (out - mu) / jnp.sqrt(var + LN_EPS) * params["gamma"][0] + params["beta"][0]
    logits = y @ params["w_pred"] + params["b_pred"][0]
    return jax.nn.softmax(logits, axis=-1)


def init_params(key):
    ks = jax.random.split(key, 6)
    s = 0.1
    return {
        "emb_table": jax.random.normal(ks[0], (VOCAB, EMB_DIM), jnp.float32) * s,
        "w_ih":  jax.random.normal(ks[1], (N_LAYERS, EMB_DIM, 4 * HID_DIM), jnp.float32) * s,
        "w_hh":  jax.random.normal(ks[2], (N_LAYERS, HID_DIM, 4 * HID_DIM), jnp.float32) * s,
        "b":     jax.random.normal(ks[3], (N_LAYERS, 4 * HID_DIM), jnp.float32) * s,
        "gamma": jnp.ones((1, HID_DIM), jnp.float32),
        "beta":  jnp.zeros((1, HID_DIM), jnp.float32),
        "w_pred": jax.random.normal(ks[4], (HID_DIM, VOCAB), jnp.float32) * s,
        "b_pred": jax.random.normal(ks[5], (1, VOCAB), jnp.float32) * s,
    }


if __name__ == "__main__":
    key = jax.random.PRNGKey(0)
    kp, kh, kc, kt = jax.random.split(key, 4)
    params = init_params(kp)
    hidden = jax.random.normal(kh, (N_LAYERS, BATCH, HID_DIM), jnp.float32) * 0.1
    cell   = jax.random.normal(kc, (N_LAYERS, BATCH, HID_DIM), jnp.float32) * 0.1
    tokens = jax.random.randint(kt, (BATCH, SEQ_LEN), 0, VOCAB)

    out = lstm_dec_forward(params, hidden, cell, tokens)
    out = jax.block_until_ready(out)

    ref = ref_forward(params, hidden, cell, tokens)
    assert out.shape == (BATCH, SEQ_LEN, VOCAB)
    # tolerance leaves headroom for MXU f32 matmul pass differences vs the XLA reference
    if not jnp.allclose(out, ref, atol=5e-4, rtol=5e-3):
        raise AssertionError("Pallas kernel output mismatches JAX reference")
    print("KERNEL_OK")
</pallas_src>

<mosaic_0001>
module attributes {stable_mosaic.version = 11 : i64} {
  func.func @_lstm_dec_kernel(%arg0: i32, %arg1: memref<16xi32, #tpu.memory_space<smem>>, %arg2: memref<8x32xf32, #tpu.memory_space<vmem>>, %arg3: memref<272x128xf32, #tpu.memory_space<vmem>>, %arg4: memref<16x128xf32, #tpu.memory_space<vmem>>) attributes {dimension_semantics = [#tpu.dimension_semantics<arbitrary>], iteration_bounds = array<i64: 1>, scalar_prefetch = 1 : i64, scratch_operands = 0 : i64, tpu.core_type = #tpu.core_type<tc>, window_params = [{pipeline_mode = #tpu.pipeline_mode<synchronous>, transform_indices = @transform_0, window_bounds = array<i64: 8, 32>}, {pipeline_mode = #tpu.pipeline_mode<synchronous>, transform_indices = @transform_1, window_bounds = array<i64: 272, 128>}, {pipeline_mode = #tpu.pipeline_mode<synchronous>, transform_indices = @transform_2, window_bounds = array<i64: 16, 128>}]} {
    %c0 = arith.constant 0 : index
    %c0_0 = arith.constant 0 : index
    %0 = vector.load %arg2[%c0, %c0_0] : memref<8x32xf32, #tpu.memory_space<vmem>>, vector<8x32xf32>
    %1 = vector.extract_strided_slice %0 {offsets = [0, 0], sizes = [2, 32], strides = [1, 1]} : vector<8x32xf32> to vector<2x32xf32>
    %2 = vector.extract_strided_slice %0 {offsets = [2, 0], sizes = [2, 32], strides = [1, 1]} : vector<8x32xf32> to vector<2x32xf32>
    %3 = vector.extract_strided_slice %0 {offsets = [4, 0], sizes = [2, 32], strides = [1, 1]} : vector<8x32xf32> to vector<2x32xf32>
    %4 = vector.extract_strided_slice %0 {offsets = [6, 0], sizes = [2, 32], strides = [1, 1]} : vector<8x32xf32> to vector<2x32xf32>
    %c128 = arith.constant 128 : index
    %c0_1 = arith.constant 0 : index
    %5 = vector.load %arg3[%c128, %c0_1] : memref<272x128xf32, #tpu.memory_space<vmem>>, vector<32x128xf32>
    %c160 = arith.constant 160 : index
    %c0_2 = arith.constant 0 : index
    %6 = vector.load %arg3[%c160, %c0_2] : memref<272x128xf32, #tpu.memory_space<vmem>>, vector<64x128xf32>
    %c224 = arith.constant 224 : index
    %c0_3 = arith.constant 0 : index
    %7 = vector.load %arg3[%c224, %c0_3] : memref<272x128xf32, #tpu.memory_space<vmem>>, vector<1x128xf32>
    %8 = vector.shape_cast %7 : vector<1x128xf32> to vector<1x128xf32>
    %9 = vector.broadcast %8 : vector<1x128xf32> to vector<2x128xf32>
    %c232 = arith.constant 232 : index
    %c0_4 = arith.constant 0 : index
    %10 = vector.load %arg3[%c232, %c0_4] : memref<272x128xf32, #tpu.memory_space<vmem>>, vector<32x128xf32>
    %c264 = arith.constant 264 : index
    %c0_5 = arith.constant 0 : index
    %11 = vector.load %arg3[%c264, %c0_5] : memref<272x128xf32, #tpu.memory_space<vmem>>, vector<1x128xf32>
    %c0_6 = arith.constant 0 : index
    %12 = memref.load %arg1[%c0_6] : memref<16xi32, #tpu.memory_space<smem>>
    %13 = arith.index_cast %12 : i32 to index
    %c0_7 = arith.constant 0 : index
    %14 = vector.load %arg3[%13, %c0_7] : memref<272x128xf32, #tpu.memory_space<vmem>>, vector<1x128xf32>
    %c1 = arith.constant 1 : index
    %15 = memref.load %arg1[%c1] : memref<16xi32, #tpu.memory_space<smem>>
    %16 = arith.index_cast %15 : i32 to index
    %c0_8 = arith.constant 0 : index
    %17 = vector.load %arg3[%16, %c0_8] : memref<272x128xf32, #tpu.memory_space<vmem>>, vector<1x128xf32>
    %18 = tpu.concatenate %14, %17 in 0 : vector<1x128xf32>, vector<1x128xf32> -> vector<2x128xf32>
    %c2 = arith.constant 2 : index
    %19 = memref.load %arg1[%c2] : memref<16xi32, #tpu.memory_space<smem>>
    %20 = arith.index_cast %19 : i32 to index
    %c0_9 = arith.constant 0 : index
    %21 = vector.load %arg3[%20, %c0_9] : memref<272x128xf32, #tpu.memory_space<vmem>>, vector<1x128xf32>
    %c3 = arith.constant 3 : index
    %22 = memref.load %arg1[%c3] : memref<16xi32, #tpu.memory_space<smem>>
    %23 = arith.index_cast %22 : i32 to index
    %c0_10 = arith.constant 0 : index
    %24 = vector.load %arg3[%23, %c0_10] : memref<272x128xf32, #tpu.memory_space<vmem>>, vector<1x128xf32>
    %25 = tpu.concatenate %21, %24 in 0 : vector<1x128xf32>, vector<1x128xf32> -> vector<2x128xf32>
    %c4 = arith.constant 4 : index
    %26 = memref.load %arg1[%c4] : memref<16xi32, #tpu.memory_space<smem>>
    %27 = arith.index_cast %26 : i32 to index
    %c0_11 = arith.constant 0 : index
    %28 = vector.load %arg3[%27, %c0_11] : memref<272x128xf32, #tpu.memory_space<vmem>>, vector<1x128xf32>
    %c5 = arith.constant 5 : index
    %29 = memref.load %arg1[%c5] : memref<16xi32, #tpu.memory_space<smem>>
    %30 = arith.index_cast %29 : i32 to index
    %c0_12 = arith.constant 0 : index
    %31 = vector.load %arg3[%30, %c0_12] : memref<272x128xf32, #tpu.memory_space<vmem>>, vector<1x128xf32>
    %32 = tpu.concatenate %28, %31 in 0 : vector<1x128xf32>, vector<1x128xf32> -> vector<2x128xf32>
    %c6 = arith.constant 6 : index
    %33 = memref.load %arg1[%c6] : memref<16xi32, #tpu.memory_space<smem>>
    %34 = arith.index_cast %33 : i32 to index
    %c0_13 = arith.constant 0 : index
    %35 = vector.load %arg3[%34, %c0_13] : memref<272x128xf32, #tpu.memory_space<vmem>>, vector<1x128xf32>
    %c7 = arith.constant 7 : index
    %36 = memref.load %arg1[%c7] : memref<16xi32, #tpu.memory_space<smem>>
    %37 = arith.index_cast %36 : i32 to index
    %c0_14 = arith.constant 0 : index
    %38 = vector.load %arg3[%37, %c0_14] : memref<272x128xf32, #tpu.memory_space<vmem>>, vector<1x128xf32>
    %39 = tpu.concatenate %35, %38 in 0 : vector<1x128xf32>, vector<1x128xf32> -> vector<2x128xf32>
    %c8 = arith.constant 8 : index
    %40 = memref.load %arg1[%c8] : memref<16xi32, #tpu.memory_space<smem>>
    %41 = arith.index_cast %40 : i32 to index
    %c0_15 = arith.constant 0 : index
    %42 = vector.load %arg3[%41, %c0_15] : memref<272x128xf32, #tpu.memory_space<vmem>>, vector<1x128xf32>
    %c9 = arith.constant 9 : index
    %43 = memref.load %arg1[%c9] : memref<16xi32, #tpu.memory_space<smem>>
    %44 = arith.index_cast %43 : i32 to index
    %c0_16 = arith.constant 0 : index
    %45 = vector.load %arg3[%44, %c0_16] : memref<272x128xf32, #tpu.memory_space<vmem>>, vector<1x128xf32>
    %46 = tpu.concatenate %42, %45 in 0 : vector<1x128xf32>, vector<1x128xf32> -> vector<2x128xf32>
    %c10 = arith.constant 10 : index
    %47 = memref.load %arg1[%c10] : memref<16xi32, #tpu.memory_space<smem>>
    %48 = arith.index_cast %47 : i32 to index
    %c0_17 = arith.constant 0 : index
    %49 = vector.load %arg3[%48, %c0_17] : memref<272x128xf32, #tpu.memory_space<vmem>>, vector<1x128xf32>
    %c11 = arith.constant 11 : index
    %50 = memref.load %arg1[%c11] : memref<16xi32, #tpu.memory_space<smem>>
    %51 = arith.index_cast %50 : i32 to index
    %c0_18 = arith.constant 0 : index
    %52 = vector.load %arg3[%51, %c0_18] : memref<272x128xf32, #tpu.memory_space<vmem>>, vector<1x128xf32>
    %53 = tpu.concatenate %49, %52 in 0 : vector<1x128xf32>, vector<1x128xf32> -> vector<2x128xf32>
    %c12 = arith.constant 12 : index
    %54 = memref.load %arg1[%c12] : memref<16xi32, #tpu.memory_space<smem>>
    %55 = arith.index_cast %54 : i32 to index
    %c0_19 = arith.constant 0 : index
    %56 = vector.load %arg3[%55, %c0_19] : memref<272x128xf32, #tpu.memory_space<vmem>>, vector<1x128xf32>
    %c13 = arith.constant 13 : index
    %57 = memref.load %arg1[%c13] : memref<16xi32, #tpu.memory_space<smem>>
    %58 = arith.index_cast %57 : i32 to index
    %c0_20 = arith.constant 0 : index
    %59 = vector.load %arg3[%58, %c0_20] : memref<272x128xf32, #tpu.memory_space<vmem>>, vector<1x128xf32>
    %60 = tpu.concatenate %56, %59 in 0 : vector<1x128xf32>, vector<1x128xf32> -> vector<2x128xf32>
    %c14 = arith.constant 14 : index
    %61 = memref.load %arg1[%c14] : memref<16xi32, #tpu.memory_space<smem>>
    %62 = arith.index_cast %61 : i32 to index
    %c0_21 = arith.constant 0 : index
    %63 = vector.load %arg3[%62, %c0_21] : memref<272x128xf32, #tpu.memory_space<vmem>>, vector<1x128xf32>
    %c15 = arith.constant 15 : index
    %64 = memref.load %arg1[%c15] : memref<16xi32, #tpu.memory_space<smem>>
    %65 = arith.index_cast %64 : i32 to index
    %c0_22 = arith.constant 0 : index
    %66 = vector.load %arg3[%65, %c0_22] : memref<272x128xf32, #tpu.memory_space<vmem>>, vector<1x128xf32>
    %67 = tpu.concatenate %63, %66 in 0 : vector<1x128xf32>, vector<1x128xf32> -> vector<2x128xf32>
    %cst = arith.constant dense<0.000000e+00> : vector<2x128xf32>
    %68 = tpu.matmul %1, %5, %cst {dimension_numbers = #tpu.dot_dimension_numbers<[1], [0], [0], [1], [0, 0, 1, 1], [], []>} : vector<2x32xf32>, vector<32x128xf32>, vector<2x128xf32> -> vector<2x128xf32>
    %69 = arith.addf %18, %68 : vector<2x128xf32>
    %70 = vector.extract_strided_slice %69 {offsets = [0, 0], sizes = [2, 32], strides = [1, 1]} : vector<2x128xf32> to vector<2x32xf32>
    %71 = arith.negf %70 : vector<2x32xf32>
    %72 = math.exp %71 : vector<2x32xf32>
    %cst_23 = arith.constant 1.000000e+00 : f32
    %73 = vector.broadcast %cst_23 : f32 to vector<2x32xf32>
    %74 = arith.addf %73, %72 : vector<2x32xf32>
    %75 = arith.divf %73, %74 : vector<2x32xf32>
    %76 = vector.extract_strided_slice %69 {offsets = [0, 32], sizes = [2, 32], strides = [1, 1]} : vector<2x128xf32> to vector<2x32xf32>
    %77 = arith.negf %76 : vector<2x32xf32>
    %78 = math.exp %77 : vector<2x32xf32>
    %cst_24 = arith.constant 1.000000e+00 : f32
    %79 = vector.broadcast %cst_24 : f32 to vector<2x32xf32>
    %80 = arith.addf %79, %78 : vector<2x32xf32>
    %81 = arith.divf %79, %80 : vector<2x32xf32>
    %82 = vector.extract_strided_slice %69 {offsets = [0, 64], sizes = [2, 32], strides = [1, 1]} : vector<2x128xf32> to vector<2x32xf32>
    %83 = math.tanh %82 : vector<2x32xf32>
    %84 = vector.extract_strided_slice %69 {offsets = [0, 96], sizes = [2, 32], strides = [1, 1]} : vector<2x128xf32> to vector<2x32xf32>
    %85 = arith.negf %84 : vector<2x32xf32>
    %86 = math.exp %85 : vector<2x32xf32>
    %cst_25 = arith.constant 1.000000e+00 : f32
    %87 = vector.broadcast %cst_25 : f32 to vector<2x32xf32>
    %88 = arith.addf %87, %86 : vector<2x32xf32>
    %89 = arith.divf %87, %88 : vector<2x32xf32>
    %90 = arith.mulf %81, %3 : vector<2x32xf32>
    %91 = arith.mulf %75, %83 : vector<2x32xf32>
    %92 = arith.addf %90, %91 : vector<2x32xf32>
    %93 = math.tanh %92 : vector<2x32xf32>
    %94 = arith.mulf %89, %93 : vector<2x32xf32>
    %cst_26 = arith.constant dense<0.000000e+00> : vector<2x128xf32>
    %95 = tpu.matmul %94, %5, %cst_26 {dimension_numbers = #tpu.dot_dimension_numbers<[1], [0], [0], [1], [0, 0, 1, 1], [], []>} : vector<2x32xf32>, vector<32x128xf32>, vector<2x128xf32> -> vector<2x128xf32>
    %96 = arith.addf %25, %95 : vector<2x128xf32>
    %97 = vector.extract_strided_slice %96 {offsets = [0, 0], sizes = [2, 32], strides = [1, 1]} : vector<2x128xf32> to vector<2x32xf32>
    %98 = arith.negf %97 : vector<2x32xf32>
    %99 = math.exp %98 : vector<2x32xf32>
    %cst_27 = arith.constant 1.000000e+00 : f32
    %100 = vector.broadcast %cst_27 : f32 to vector<2x32xf32>
    %101 = arith.addf %100, %99 : vector<2x32xf32>
    %102 = arith.divf %100, %101 : vector<2x32xf32>
    %103 = vector.extract_strided_slice %96 {offsets = [0, 32], sizes = [2, 32], strides = [1, 1]} : vector<2x128xf32> to vector<2x32xf32>
    %104 = arith.negf %103 : vector<2x32xf32>
    %105 = math.exp %104 : vector<2x32xf32>
    %cst_28 = arith.constant 1.000000e+00 : f32
    %106 = vector.broadcast %cst_28 : f32 to vector<2x32xf32>
    %107 = arith.addf %106, %105 : vector<2x32xf32>
    %108 = arith.divf %106, %107 : vector<2x32xf32>
    %109 = vector.extract_strided_slice %96 {offsets = [0, 64], sizes = [2, 32], strides = [1, 1]} : vector<2x128xf32> to vector<2x32xf32>
    %110 = math.tanh %109 : vector<2x32xf32>
    %111 = vector.extract_strided_slice %96 {offsets = [0, 96], sizes = [2, 32], strides = [1, 1]} : vector<2x128xf32> to vector<2x32xf32>
    %112 = arith.negf %111 : vector<2x32xf32>
    %113 = math.exp %112 : vector<2x32xf32>
    %cst_29 = arith.constant 1.000000e+00 : f32
    %114 = vector.broadcast %cst_29 : f32 to vector<2x32xf32>
    %115 = arith.addf %114, %113 : vector<2x32xf32>
    %116 = arith.divf %114, %115 : vector<2x32xf32>
    %117 = arith.mulf %108, %92 : vector<2x32xf32>
    %118 = arith.mulf %102, %110 : vector<2x32xf32>
    %119 = arith.addf %117, %118 : vector<2x32xf32>
    %120 = math.tanh %119 : vector<2x32xf32>
    %121 = arith.mulf %116, %120 : vector<2x32xf32>
    %122 = tpu.concatenate %94, %2 in 1 : vector<2x32xf32>, vector<2x32xf32> -> vector<2x64xf32>
    %cst_30 = arith.constant dense<0.000000e+00> : vector<2x128xf32>
    %123 = tpu.matmul %122, %6, %cst_30 {dimension_numbers = #tpu.dot_dimension_numbers<[1], [0], [0], [1], [0, 0, 1, 1], [], []>} : vector<2x64xf32>, vector<64x128xf32>, vector<2x128xf32> -> vector<2x128xf32>
    %124 = arith.addf %123, %9 : vector<2x128xf32>
    %125 = vector.extract_strided_slice %124 {offsets = [0, 0], sizes = [2, 32], strides = [1, 1]} : vector<2x128xf32> to vector<2x32xf32>
    %126 = arith.negf %125 : vector<2x32xf32>
    %127 = math.exp %126 : vector<2x32xf32>
    %cst_31 = arith.constant 1.000000e+00 : f32
    %128 = vector.broadcast %cst_31 : f32 to vector<2x32xf32>
    %129 = arith.addf %128, %127 : vector<2x32xf32>
    %130 = arith.divf %128, %129 : vector<2x32xf32>
    %131 = vector.extract_strided_slice %124 {offsets = [0, 32], sizes = [2, 32], strides = [1, 1]} : vector<2x128xf32> to vector<2x32xf32>
    %132 = arith.negf %131 : vector<2x32xf32>
    %133 = math.exp %132 : vector<2x32xf32>
    %cst_32 = arith.constant 1.000000e+00 : f32
    %134 = vector.broadcast %cst_32 : f32 to vector<2x32xf32>
    %135 = arith.addf %134, %133 : vector<2x32xf32>
    %136 = arith.divf %134, %135 : vector<2x32xf32>
    %137 = vector.extract_strided_slice %124 {offsets = [0, 64], sizes = [2, 32], strides = [1, 1]} : vector<2x128xf32> to vector<2x32xf32>
    %138 = math.tanh %137 : vector<2x32xf32>
    %139 = vector.extract_strided_slice %124 {offsets = [0, 96], sizes = [2, 32], strides = [1, 1]} : vector<2x128xf32> to vector<2x32xf32>
    %140 = arith.negf %139 : vector<2x32xf32>
    %141 = math.exp %140 : vector<2x32xf32>
    %cst_33 = arith.constant 1.000000e+00 : f32
    %142 = vector.broadcast %cst_33 : f32 to vector<2x32xf32>
    %143 = arith.addf %142, %141 : vector<2x32xf32>
    %144 = arith.divf %142, %143 : vector<2x32xf32>
    %145 = arith.mulf %136, %4 : vector<2x32xf32>
    %146 = arith.mulf %130, %138 : vector<2x32xf32>
    %147 = arith.addf %145, %146 : vector<2x32xf32>
    %148 = math.tanh %147 : vector<2x32xf32>
    %149 = arith.mulf %144, %148 : vector<2x32xf32>
    %cst_34 = arith.constant dense<0.000000e+00> : vector<2x128xf32>
    %150 = tpu.matmul %121, %5, %cst_34 {dimension_numbers = #tpu.dot_dimension_numbers<[1], [0], [0], [1], [0, 0, 1, 1], [], []>} : vector<2x32xf32>, vector<32x128xf32>, vector<2x128xf32> -> vector<2x128xf32>
    %151 = arith.addf %32, %150 : vector<2x128xf32>
    %152 = vector.extract_strided_slice %151 {offsets = [0, 0], sizes = [2, 32], strides = [1, 1]} : vector<2x128xf32> to vector<2x32xf32>
    %153 = arith.negf %152 : vector<2x32xf32>
    %154 = math.exp %153 : vector<2x32xf32>
    %cst_35 = arith.constant 1.000000e+00 : f32
    %155 = vector.broadcast %cst_35 : f32 to vector<2x32xf32>
    %156 = arith.addf %155, %154 : vector<2x32xf32>
    %157 = arith.divf %155, %156 : vector<2x32xf32>
    %158 = vector.extract_strided_slice %151 {offsets = [0, 32], sizes = [2, 32], strides = [1, 1]} : vector<2x128xf32> to vector<2x32xf32>
    %159 = arith.negf %158 : vector<2x32xf32>
    %160 = math.exp %159 : vector<2x32xf32>
    %cst_36 = arith.constant 1.000000e+00 : f32
    %161 = vector.broadcast %cst_36 : f32 to vector<2x32xf32>
    %162 = arith.addf %161, %160 : vector<2x32xf32>
    %163 = arith.divf %161, %162 : vector<2x32xf32>
    %164 = vector.extract_strided_slice %151 {offsets = [0, 64], sizes = [2, 32], strides = [1, 1]} : vector<2x128xf32> to vector<2x32xf32>
    %165 = math.tanh %164 : vector<2x32xf32>
    %166 = vector.extract_strided_slice %151 {offsets = [0, 96], sizes = [2, 32], strides = [1, 1]} : vector<2x128xf32> to vector<2x32xf32>
    %167 = arith.negf %166 : vector<2x32xf32>
    %168 = math.exp %167 : vector<2x32xf32>
    %cst_37 = arith.constant 1.000000e+00 : f32
    %169 = vector.broadcast %cst_37 : f32 to vector<2x32xf32>
    %170 = arith.addf %169, %168 : vector<2x32xf32>
    %171 = arith.divf %169, %170 : vector<2x32xf32>
    %172 = arith.mulf %163, %119 : vector<2x32xf32>
    %173 = arith.mulf %157, %165 : vector<2x32xf32>
    %174 = arith.addf %172, %173 : vector<2x32xf32>
    %175 = math.tanh %174 : vector<2x32xf32>
    %176 = arith.mulf %171, %175 : vector<2x32xf32>
    %177 = tpu.concatenate %121, %149 in 1 : vector<2x32xf32>, vector<2x32xf32> -> vector<2x64xf32>
    %cst_38 = arith.constant dense<0.000000e+00> : vector<2x128xf32>
    %178 = tpu.matmul %177, %6, %cst_38 {dimension_numbers = #tpu.dot_dimension_numbers<[1], [0], [0], [1], [0, 0, 1, 1], [], []>} : vector<2x64xf32>, vector<64x128xf32>, vector<2x128xf32> -> vector<2x128xf32>
    %179 = arith.addf %178, %9 : vector<2x128xf32>
    %180 = vector.extract_strided_slice %179 {offsets = [0, 0], sizes = [2, 32], strides = [1, 1]} : vector<2x128xf32> to vector<2x32xf32>
    %181 = arith.negf %180 : vector<2x32xf32>
    %182 = math.exp %181 : vector<2x32xf32>
    %cst_39 = arith.constant 1.000000e+00 : f32
    %183 = vector.broadcast %cst_39 : f32 to vector<2x32xf32>
    %184 = arith.addf %183, %182 : vector<2x32xf32>
    %185 = arith.divf %183, %184 : vector<2x32xf32>
    %186 = vector.extract_strided_slice %179 {offsets = [0, 32], sizes = [2, 32], strides = [1, 1]} : vector<2x128xf32> to vector<2x32xf32>
    %187 = arith.negf %186 : vector<2x32xf32>
    %188 = math.exp %187 : vector<2x32xf32>
    %cst_40 = arith.constant 1.000000e+00 : f32
    %189 = vector.broadcast %cst_40 : f32 to vector<2x32xf32>
    %190 = arith.addf %189, %188 : vector<2x32xf32>
    %191 = arith.divf %189, %190 : vector<2x32xf32>
    %192 = vector.extract_strided_slice %179 {offsets = [0, 64], sizes = [2, 32], strides = [1, 1]} : vector<2x128xf32> to vector<2x32xf32>
    %193 = math.tanh %192 : vector<2x32xf32>
    %194 = vector.extract_strided_slice %179 {offsets = [0, 96], sizes = [2, 32], strides = [1, 1]} : vector<2x128xf32> to vector<2x32xf32>
    %195 = arith.negf %194 : vector<2x32xf32>
    %196 = math.exp %195 : vector<2x32xf32>
    %cst_41 = arith.constant 1.000000e+00 : f32
    %197 = vector.broadcast %cst_41 : f32 to vector<2x32xf32>
    %198 = arith.addf %197, %196 : vector<2x32xf32>
    %199 = arith.divf %197, %198 : vector<2x32xf32>
    %200 = arith.mulf %191, %147 : vector<2x32xf32>
    %201 = arith.mulf %185, %193 : vector<2x32xf32>
    %202 = arith.addf %200, %201 : vector<2x32xf32>
    %203 = math.tanh %202 : vector<2x32xf32>
    %204 = arith.mulf %199, %203 : vector<2x32xf32>
    %cst_42 = arith.constant dense<0.000000e+00> : vector<2x128xf32>
    %205 = tpu.matmul %176, %5, %cst_42 {dimension_numbers = #tpu.dot_dimension_numbers<[1], [0], [0], [1], [0, 0, 1, 1], [], []>} : vector<2x32xf32>, vector<32x128xf32>, vector<2x128xf32> -> vector<2x128xf32>
    %206 = arith.addf %39, %205 : vector<2x128xf32>
    %207 = vector.extract_strided_slice %206 {offsets = [0, 0], sizes = [2, 32], strides = [1, 1]} : vector<2x128xf32> to vector<2x32xf32>
    %208 = arith.negf %207 : vector<2x32xf32>
    %209 = math.exp %208 : vector<2x32xf32>
    %cst_43 = arith.constant 1.000000e+00 : f32
    %210 = vector.broadcast %cst_43 : f32 to vector<2x32xf32>
    %211 = arith.addf %210, %209 : vector<2x32xf32>
    %212 = arith.divf %210, %211 : vector<2x32xf32>
    %213 = vector.extract_strided_slice %206 {offsets = [0, 32], sizes = [2, 32], strides = [1, 1]} : vector<2x128xf32> to vector<2x32xf32>
    %214 = arith.negf %213 : vector<2x32xf32>
    %215 = math.exp %214 : vector<2x32xf32>
    %cst_44 = arith.constant 1.000000e+00 : f32
    %216 = vector.broadcast %cst_44 : f32 to vector<2x32xf32>
    %217 = arith.addf %216, %215 : vector<2x32xf32>
    %218 = arith.divf %216, %217 : vector<2x32xf32>
    %219 = vector.extract_strided_slice %206 {offsets = [0, 64], sizes = [2, 32], strides = [1, 1]} : vector<2x128xf32> to vector<2x32xf32>
    %220 = math.tanh %219 : vector<2x32xf32>
    %221 = vector.extract_strided_slice %206 {offsets = [0, 96], sizes = [2, 32], strides = [1, 1]} : vector<2x128xf32> to vector<2x32xf32>
    %222 = arith.negf %221 : vector<2x32xf32>
    %223 = math.exp %222 : vector<2x32xf32>
    %cst_45 = arith.constant 1.000000e+00 : f32
    %224 = vector.broadcast %cst_45 : f32 to vector<2x32xf32>
    %225 = arith.addf %224, %223 : vector<2x32xf32>
    %226 = arith.divf %224, %225 : vector<2x32xf32>
    %227 = arith.mulf %218, %174 : vector<2x32xf32>
    %228 = arith.mulf %212, %220 : vector<2x32xf32>
    %229 = arith.addf %227, %228 : vector<2x32xf32>
    %230 = math.tanh %229 : vector<2x32xf32>
    %231 = arith.mulf %226, %230 : vector<2x32xf32>
    %232 = tpu.concatenate %176, %204 in 1 : vector<2x32xf32>, vector<2x32xf32> -> vector<2x64xf32>
    %cst_46 = arith.constant dense<0.000000e+00> : vector<2x128xf32>
    %233 = tpu.matmul %232, %6, %cst_46 {dimension_numbers = #tpu.dot_dimension_numbers<[1], [0], [0], [1], [0, 0, 1, 1], [], []>} : vector<2x64xf32>, vector<64x128xf32>, vector<2x128xf32> -> vector<2x128xf32>
    %234 = arith.addf %233, %9 : vector<2x128xf32>
    %235 = vector.extract_strided_slice %234 {offsets = [0, 0], sizes = [2, 32], strides = [1, 1]} : vector<2x128xf32> to vector<2x32xf32>
    %236 = arith.negf %235 : vector<2x32xf32>
    %237 = math.exp %236 : vector<2x32xf32>
    %cst_47 = arith.constant 1.000000e+00 : f32
    %238 = vector.broadcast %cst_47 : f32 to vector<2x32xf32>
    %239 = arith.addf %238, %237 : vector<2x32xf32>
    %240 = arith.divf %238, %239 : vector<2x32xf32>
    %241 = vector.extract_strided_slice %234 {offsets = [0, 32], sizes = [2, 32], strides = [1, 1]} : vector<2x128xf32> to vector<2x32xf32>
    %242 = arith.negf %241 : vector<2x32xf32>
    %243 = math.exp %242 : vector<2x32xf32>
    %cst_48 = arith.constant 1.000000e+00 : f32
    %244 = vector.broadcast %cst_48 : f32 to vector<2x32xf32>
    %245 = arith.addf %244, %243 : vector<2x32xf32>
    %246 = arith.divf %244, %245 : vector<2x32xf32>
    %247 = vector.extract_strided_slice %234 {offsets = [0, 64], sizes = [2, 32], strides = [1, 1]} : vector<2x128xf32> to vector<2x32xf32>
    %248 = math.tanh %247 : vector<2x32xf32>
    %249 = vector.extract_strided_slice %234 {offsets = [0, 96], sizes = [2, 32], strides = [1, 1]} : vector<2x128xf32> to vector<2x32xf32>
    %250 = arith.negf %249 : vector<2x32xf32>
    %251 = math.exp %250 : vector<2x32xf32>
    %cst_49 = arith.constant 1.000000e+00 : f32
    %252 = vector.broadcast %cst_49 : f32 to vector<2x32xf32>
    %253 = arith.addf %252, %251 : vector<2x32xf32>
    %254 = arith.divf %252, %253 : vector<2x32xf32>
    %255 = arith.mulf %246, %202 : vector<2x32xf32>
    %256 = arith.mulf %240, %248 : vector<2x32xf32>
    %257 = arith.addf %255, %256 : vector<2x32xf32>
    %258 = math.tanh %257 : vector<2x32xf32>
    %259 = arith.mulf %254, %258 : vector<2x32xf32>
    %cst_50 = arith.constant dense<0.000000e+00> : vector<2x128xf32>
    %260 = tpu.matmul %231, %5, %cst_50 {dimension_numbers = #tpu.dot_dimension_numbers<[1], [0], [0], [1], [0, 0, 1, 1], [], []>} : vector<2x32xf32>, vector<32x128xf32>, vector<2x128xf32> -> vector<2x128xf32>
    %261 = arith.addf %46, %260 : vector<2x128xf32>
    %262 = vector.extract_strided_slice %261 {offsets = [0, 0], sizes = [2, 32], strides = [1, 1]} : vector<2x128xf32> to vector<2x32xf32>
    %263 = arith.negf %262 : vector<2x32xf32>
    %264 = math.exp %263 : vector<2x32xf32>
    %cst_51 = arith.constant 1.000000e+00 : f32
    %265 = vector.broadcast %cst_51 : f32 to vector<2x32xf32>
    %266 = arith.addf %265, %264 : vector<2x32xf32>
    %267 = arith.divf %265, %266 : vector<2x32xf32>
    %268 = vector.extract_strided_slice %261 {offsets = [0, 32], sizes = [2, 32], strides = [1, 1]} : vector<2x128xf32> to vector<2x32xf32>
    %269 = arith.negf %268 : vector<2x32xf32>
    %270 = math.exp %269 : vector<2x32xf32>
    %cst_52 = arith.constant 1.000000e+00 : f32
    %271 = vector.broadcast %cst_52 : f32 to vector<2x32xf32>
    %272 = arith.addf %271, %270 : vector<2x32xf32>
    %273 = arith.divf %271, %272 : vector<2x32xf32>
    %274 = vector.extract_strided_slice %261 {offsets = [0, 64], sizes = [2, 32], strides = [1, 1]} : vector<2x128xf32> to vector<2x32xf32>
    %275 = math.tanh %274 : vector<2x32xf32>
    %276 = vector.extract_strided_slice %261 {offsets = [0, 96], sizes = [2, 32], strides = [1, 1]} : vector<2x128xf32> to vector<2x32xf32>
    %277 = arith.negf %276 : vector<2x32xf32>
    %278 = math.exp %277 : vector<2x32xf32>
    %cst_53 = arith.constant 1.000000e+00 : f32
    %279 = vector.broadcast %cst_53 : f32 to vector<2x32xf32>
    %280 = arith.addf %279, %278 : vector<2x32xf32>
    %281 = arith.divf %279, %280 : vector<2x32xf32>
    %282 = arith.mulf %273, %229 : vector<2x32xf32>
    %283 = arith.mulf %267, %275 : vector<2x32xf32>
    %284 = arith.addf %282, %283 : vector<2x32xf32>
    %285 = math.tanh %284 : vector<2x32xf32>
    %286 = arith.mulf %281, %285 : vector<2x32xf32>
    %287 = tpu.concatenate %231, %259 in 1 : vector<2x32xf32>, vector<2x32xf32> -> vector<2x64xf32>
    %cst_54 = arith.constant dense<0.000000e+00> : vector<2x128xf32>
    %288 = tpu.matmul %287, %6, %cst_54 {dimension_numbers = #tpu.dot_dimension_numbers<[1], [0], [0], [1], [0, 0, 1, 1], [], []>} : vector<2x64xf32>, vector<64x128xf32>, vector<2x128xf32> -> vector<2x128xf32>
    %289 = arith.addf %288, %9 : vector<2x128xf32>
    %290 = vector.extract_strided_slice %289 {offsets = [0, 0], sizes = [2, 32], strides = [1, 1]} : vector<2x128xf32> to vector<2x32xf32>
    %291 = arith.negf %290 : vector<2x32xf32>
    %292 = math.exp %291 : vector<2x32xf32>
    %cst_55 = arith.constant 1.000000e+00 : f32
    %293 = vector.broadcast %cst_55 : f32 to vector<2x32xf32>
    %294 = arith.addf %293, %292 : vector<2x32xf32>
    %295 = arith.divf %293, %294 : vector<2x32xf32>
    %296 = vector.extract_strided_slice %289 {offsets = [0, 32], sizes = [2, 32], strides = [1, 1]} : vector<2x128xf32> to vector<2x32xf32>
    %297 = arith.negf %296 : vector<2x32xf32>
    %298 = math.exp %297 : vector<2x32xf32>
    %cst_56 = arith.constant 1.000000e+00 : f32
    %299 = vector.broadcast %cst_56 : f32 to vector<2x32xf32>
    %300 = arith.addf %299, %298 : vector<2x32xf32>
    %301 = arith.divf %299, %300 : vector<2x32xf32>
    %302 = vector.extract_strided_slice %289 {offsets = [0, 64], sizes = [2, 32], strides = [1, 1]} : vector<2x128xf32> to vector<2x32xf32>
    %303 = math.tanh %302 : vector<2x32xf32>
    %304 = vector.extract_strided_slice %289 {offsets = [0, 96], sizes = [2, 32], strides = [1, 1]} : vector<2x128xf32> to vector<2x32xf32>
    %305 = arith.negf %304 : vector<2x32xf32>
    %306 = math.exp %305 : vector<2x32xf32>
    %cst_57 = arith.constant 1.000000e+00 : f32
    %307 = vector.broadcast %cst_57 : f32 to vector<2x32xf32>
    %308 = arith.addf %307, %306 : vector<2x32xf32>
    %309 = arith.divf %307, %308 : vector<2x32xf32>
    %310 = arith.mulf %301, %257 : vector<2x32xf32>
    %311 = arith.mulf %295, %303 : vector<2x32xf32>
    %312 = arith.addf %310, %311 : vector<2x32xf32>
    %313 = math.tanh %312 : vector<2x32xf32>
    %314 = arith.mulf %309, %313 : vector<2x32xf32>
    %cst_58 = arith.constant dense<0.000000e+00> : vector<2x128xf32>
    %315 = tpu.matmul %286, %5, %cst_58 {dimension_numbers = #tpu.dot_dimension_numbers<[1], [0], [0], [1], [0, 0, 1, 1], [], []>} : vector<2x32xf32>, vector<32x128xf32>, vector<2x128xf32> -> vector<2x128xf32>
    %316 = arith.addf %53, %315 : vector<2x128xf32>
    %317 = vector.extract_strided_slice %316 {offsets = [0, 0], sizes = [2, 32], strides = [1, 1]} : vector<2x128xf32> to vector<2x32xf32>
    %318 = arith.negf %317 : vector<2x32xf32>
    %319 = math.exp %318 : vector<2x32xf32>
    %cst_59 = arith.constant 1.000000e+00 : f32
    %320 = vector.broadcast %cst_59 : f32 to vector<2x32xf32>
    %321 = arith.addf %320, %319 : vector<2x32xf32>
    %322 = arith.divf %320, %321 : vector<2x32xf32>
    %323 = vector.extract_strided_slice %316 {offsets = [0, 32], sizes = [2, 32], strides = [1, 1]} : vector<2x128xf32> to vector<2x32xf32>
    %324 = arith.negf %323 : vector<2x32xf32>
    %325 = math.exp %324 : vector<2x32xf32>
    %cst_60 = arith.constant 1.000000e+00 : f32
    %326 = vector.broadcast %cst_60 : f32 to vector<2x32xf32>
    %327 = arith.addf %326, %325 : vector<2x32xf32>
    %328 = arith.divf %326, %327 : vector<2x32xf32>
    %329 = vector.extract_strided_slice %316 {offsets = [0, 64], sizes = [2, 32], strides = [1, 1]} : vector<2x128xf32> to vector<2x32xf32>
    %330 = math.tanh %329 : vector<2x32xf32>
    %331 = vector.extract_strided_slice %316 {offsets = [0, 96], sizes = [2, 32], strides = [1, 1]} : vector<2x128xf32> to vector<2x32xf32>
    %332 = arith.negf %331 : vector<2x32xf32>
    %333 = math.exp %332 : vector<2x32xf32>
    %cst_61 = arith.constant 1.000000e+00 : f32
    %334 = vector.broadcast %cst_61 : f32 to vector<2x32xf32>
    %335 = arith.addf %334, %333 : vector<2x32xf32>
    %336 = arith.divf %334, %335 : vector<2x32xf32>
    %337 = arith.mulf %328, %284 : vector<2x32xf32>
    %338 = arith.mulf %322, %330 : vector<2x32xf32>
    %339 = arith.addf %337, %338 : vector<2x32xf32>
    %340 = math.tanh %339 : vector<2x32xf32>
    %341 = arith.mulf %336, %340 : vector<2x32xf32>
    %342 = tpu.concatenate %286, %314 in 1 : vector<2x32xf32>, vector<2x32xf32> -> vector<2x64xf32>
    %cst_62 = arith.constant dense<0.000000e+00> : vector<2x128xf32>
    %343 = tpu.matmul %342, %6, %cst_62 {dimension_numbers = #tpu.dot_dimension_numbers<[1], [0], [0], [1], [0, 0, 1, 1], [], []>} : vector<2x64xf32>, vector<64x128xf32>, vector<2x128xf32> -> vector<2x128xf32>
    %344 = arith.addf %343, %9 : vector<2x128xf32>
    %345 = vector.extract_strided_slice %344 {offsets = [0, 0], sizes = [2, 32], strides = [1, 1]} : vector<2x128xf32> to vector<2x32xf32>
    %346 = arith.negf %345 : vector<2x32xf32>
    %347 = math.exp %346 : vector<2x32xf32>
    %cst_63 = arith.constant 1.000000e+00 : f32
    %348 = vector.broadcast %cst_63 : f32 to vector<2x32xf32>
    %349 = arith.addf %348, %347 : vector<2x32xf32>
    %350 = arith.divf %348, %349 : vector<2x32xf32>
    %351 = vector.extract_strided_slice %344 {offsets = [0, 32], sizes = [2, 32], strides = [1, 1]} : vector<2x128xf32> to vector<2x32xf32>
    %352 = arith.negf %351 : vector<2x32xf32>
    %353 = math.exp %352 : vector<2x32xf32>
    %cst_64 = arith.constant 1.000000e+00 : f32
    %354 = vector.broadcast %cst_64 : f32 to vector<2x32xf32>
    %355 = arith.addf %354, %353 : vector<2x32xf32>
    %356 = arith.divf %354, %355 : vector<2x32xf32>
    %357 = vector.extract_strided_slice %344 {offsets = [0, 64], sizes = [2, 32], strides = [1, 1]} : vector<2x128xf32> to vector<2x32xf32>
    %358 = math.tanh %357 : vector<2x32xf32>
    %359 = vector.extract_strided_slice %344 {offsets = [0, 96], sizes = [2, 32], strides = [1, 1]} : vector<2x128xf32> to vector<2x32xf32>
    %360 = arith.negf %359 : vector<2x32xf32>
    %361 = math.exp %360 : vector<2x32xf32>
    %cst_65 = arith.constant 1.000000e+00 : f32
    %362 = vector.broadcast %cst_65 : f32 to vector<2x32xf32>
    %363 = arith.addf %362, %361 : vector<2x32xf32>
    %364 = arith.divf %362, %363 : vector<2x32xf32>
    %365 = arith.mulf %356, %312 : vector<2x32xf32>
    %366 = arith.mulf %350, %358 : vector<2x32xf32>
    %367 = arith.addf %365, %366 : vector<2x32xf32>
    %368 = math.tanh %367 : vector<2x32xf32>
    %369 = arith.mulf %364, %368 : vector<2x32xf32>
    %cst_66 = arith.constant dense<0.000000e+00> : vector<2x128xf32>
    %370 = tpu.matmul %341, %5, %cst_66 {dimension_numbers = #tpu.dot_dimension_numbers<[1], [0], [0], [1], [0, 0, 1, 1], [], []>} : vector<2x32xf32>, vector<32x128xf32>, vector<2x128xf32> -> vector<2x128xf32>
    %371 = arith.addf %60, %370 : vector<2x128xf32>
    %372 = vector.extract_strided_slice %371 {offsets = [0, 0], sizes = [2, 32], strides = [1, 1]} : vector<2x128xf32> to vector<2x32xf32>
    %373 = arith.negf %372 : vector<2x32xf32>
    %374 = math.exp %373 : vector<2x32xf32>
    %cst_67 = arith.constant 1.000000e+00 : f32
    %375 = vector.broadcast %cst_67 : f32 to vector<2x32xf32>
    %376 = arith.addf %375, %374 : vector<2x32xf32>
    %377 = arith.divf %375, %376 : vector<2x32xf32>
    %378 = vector.extract_strided_slice %371 {offsets = [0, 32], sizes = [2, 32], strides = [1, 1]} : vector<2x128xf32> to vector<2x32xf32>
    %379 = arith.negf %378 : vector<2x32xf32>
    %380 = math.exp %379 : vector<2x32xf32>
    %cst_68 = arith.constant 1.000000e+00 : f32
    %381 = vector.broadcast %cst_68 : f32 to vector<2x32xf32>
    %382 = arith.addf %381, %380 : vector<2x32xf32>
    %383 = arith.divf %381, %382 : vector<2x32xf32>
    %384 = vector.extract_strided_slice %371 {offsets = [0, 64], sizes = [2, 32], strides = [1, 1]} : vector<2x128xf32> to vector<2x32xf32>
    %385 = math.tanh %384 : vector<2x32xf32>
    %386 = vector.extract_strided_slice %371 {offsets = [0, 96], sizes = [2, 32], strides = [1, 1]} : vector<2x128xf32> to vector<2x32xf32>
    %387 = arith.negf %386 : vector<2x32xf32>
    %388 = math.exp %387 : vector<2x32xf32>
    %cst_69 = arith.constant 1.000000e+00 : f32
    %389 = vector.broadcast %cst_69 : f32 to vector<2x32xf32>
    %390 = arith.addf %389, %388 : vector<2x32xf32>
    %391 = arith.divf %389, %390 : vector<2x32xf32>
    %392 = arith.mulf %383, %339 : vector<2x32xf32>
    %393 = arith.mulf %377, %385 : vector<2x32xf32>
    %394 = arith.addf %392, %393 : vector<2x32xf32>
    %395 = math.tanh %394 : vector<2x32xf32>
    %396 = arith.mulf %391, %395 : vector<2x32xf32>
    %397 = tpu.concatenate %341, %369 in 1 : vector<2x32xf32>, vector<2x32xf32> -> vector<2x64xf32>
    %cst_70 = arith.constant dense<0.000000e+00> : vector<2x128xf32>
    %398 = tpu.matmul %397, %6, %cst_70 {dimension_numbers = #tpu.dot_dimension_numbers<[1], [0], [0], [1], [0, 0, 1, 1], [], []>} : vector<2x64xf32>, vector<64x128xf32>, vector<2x128xf32> -> vector<2x128xf32>
    %399 = arith.addf %398, %9 : vector<2x128xf32>
    %400 = vector.extract_strided_slice %399 {offsets = [0, 0], sizes = [2, 32], strides = [1, 1]} : vector<2x128xf32> to vector<2x32xf32>
    %401 = arith.negf %400 : vector<2x32xf32>
    %402 = math.exp %401 : vector<2x32xf32>
    %cst_71 = arith.constant 1.000000e+00 : f32
    %403 = vector.broadcast %cst_71 : f32 to vector<2x32xf32>
    %404 = arith.addf %403, %402 : vector<2x32xf32>
    %405 = arith.divf %403, %404 : vector<2x32xf32>
    %406 = vector.extract_strided_slice %399 {offsets = [0, 32], sizes = [2, 32], strides = [1, 1]} : vector<2x128xf32> to vector<2x32xf32>
    %407 = arith.negf %406 : vector<2x32xf32>
    %408 = math.exp %407 : vector<2x32xf32>
    %cst_72 = arith.constant 1.000000e+00 : f32
    %409 = vector.broadcast %cst_72 : f32 to vector<2x32xf32>
    %410 = arith.addf %409, %408 : vector<2x32xf32>
    %411 = arith.divf %409, %410 : vector<2x32xf32>
    %412 = vector.extract_strided_slice %399 {offsets = [0, 64], sizes = [2, 32], strides = [1, 1]} : vector<2x128xf32> to vector<2x32xf32>
    %413 = math.tanh %412 : vector<2x32xf32>
    %414 = vector.extract_strided_slice %399 {offsets = [0, 96], sizes = [2, 32], strides = [1, 1]} : vector<2x128xf32> to vector<2x32xf32>
    %415 = arith.negf %414 : vector<2x32xf32>
    %416 = math.exp %415 : vector<2x32xf32>
    %cst_73 = arith.constant 1.000000e+00 : f32
    %417 = vector.broadcast %cst_73 : f32 to vector<2x32xf32>
    %418 = arith.addf %417, %416 : vector<2x32xf32>
    %419 = arith.divf %417, %418 : vector<2x32xf32>
    %420 = arith.mulf %411, %367 : vector<2x32xf32>
    %421 = arith.mulf %405, %413 : vector<2x32xf32>
    %422 = arith.addf %420, %421 : vector<2x32xf32>
    %423 = math.tanh %422 : vector<2x32xf32>
    %424 = arith.mulf %419, %423 : vector<2x32xf32>
    %cst_74 = arith.constant dense<0.000000e+00> : vector<2x128xf32>
    %425 = tpu.matmul %396, %5, %cst_74 {dimension_numbers = #tpu.dot_dimension_numbers<[1], [0], [0], [1], [0, 0, 1, 1], [], []>} : vector<2x32xf32>, vector<32x128xf32>, vector<2x128xf32> -> vector<2x128xf32>
    %426 = arith.addf %67, %425 : vector<2x128xf32>
    %427 = vector.extract_strided_slice %426 {offsets = [0, 0], sizes = [2, 32], strides = [1, 1]} : vector<2x128xf32> to vector<2x32xf32>
    %428 = arith.negf %427 : vector<2x32xf32>
    %429 = math.exp %428 : vector<2x32xf32>
    %cst_75 = arith.constant 1.000000e+00 : f32
    %430 = vector.broadcast %cst_75 : f32 to vector<2x32xf32>
    %431 = arith.addf %430, %429 : vector<2x32xf32>
    %432 = arith.divf %430, %431 : vector<2x32xf32>
    %433 = vector.extract_strided_slice %426 {offsets = [0, 32], sizes = [2, 32], strides = [1, 1]} : vector<2x128xf32> to vector<2x32xf32>
    %434 = arith.negf %433 : vector<2x32xf32>
    %435 = math.exp %434 : vector<2x32xf32>
    %cst_76 = arith.constant 1.000000e+00 : f32
    %436 = vector.broadcast %cst_76 : f32 to vector<2x32xf32>
    %437 = arith.addf %436, %435 : vector<2x32xf32>
    %438 = arith.divf %436, %437 : vector<2x32xf32>
    %439 = vector.extract_strided_slice %426 {offsets = [0, 64], sizes = [2, 32], strides = [1, 1]} : vector<2x128xf32> to vector<2x32xf32>
    %440 = math.tanh %439 : vector<2x32xf32>
    %441 = vector.extract_strided_slice %426 {offsets = [0, 96], sizes = [2, 32], strides = [1, 1]} : vector<2x128xf32> to vector<2x32xf32>
    %442 = arith.negf %441 : vector<2x32xf32>
    %443 = math.exp %442 : vector<2x32xf32>
    %cst_77 = arith.constant 1.000000e+00 : f32
    %444 = vector.broadcast %cst_77 : f32 to vector<2x32xf32>
    %445 = arith.addf %444, %443 : vector<2x32xf32>
    %446 = arith.divf %444, %445 : vector<2x32xf32>
    %447 = arith.mulf %438, %394 : vector<2x32xf32>
    %448 = arith.mulf %432, %440 : vector<2x32xf32>
    %449 = arith.addf %447, %448 : vector<2x32xf32>
    %450 = math.tanh %449 : vector<2x32xf32>
    %451 = arith.mulf %446, %450 : vector<2x32xf32>
    %452 = tpu.concatenate %396, %424 in 1 : vector<2x32xf32>, vector<2x32xf32> -> vector<2x64xf32>
    %cst_78 = arith.constant dense<0.000000e+00> : vector<2x128xf32>
    %453 = tpu.matmul %452, %6, %cst_78 {dimension_numbers = #tpu.dot_dimension_numbers<[1], [0], [0], [1], [0, 0, 1, 1], [], []>} : vector<2x64xf32>, vector<64x128xf32>, vector<2x128xf32> -> vector<2x128xf32>
    %454 = arith.addf %453, %9 : vector<2x128xf32>
    %455 = vector.extract_strided_slice %454 {offsets = [0, 0], sizes = [2, 32], strides = [1, 1]} : vector<2x128xf32> to vector<2x32xf32>
    %456 = arith.negf %455 : vector<2x32xf32>
    %457 = math.exp %456 : vector<2x32xf32>
    %cst_79 = arith.constant 1.000000e+00 : f32
    %458 = vector.broadcast %cst_79 : f32 to vector<2x32xf32>
    %459 = arith.addf %458, %457 : vector<2x32xf32>
    %460 = arith.divf %458, %459 : vector<2x32xf32>
    %461 = vector.extract_strided_slice %454 {offsets = [0, 32], sizes = [2, 32], strides = [1, 1]} : vector<2x128xf32> to vector<2x32xf32>
    %462 = arith.negf %461 : vector<2x32xf32>
    %463 = math.exp %462 : vector<2x32xf32>
    %cst_80 = arith.constant 1.000000e+00 : f32
    %464 = vector.broadcast %cst_80 : f32 to vector<2x32xf32>
    %465 = arith.addf %464, %463 : vector<2x32xf32>
    %466 = arith.divf %464, %465 : vector<2x32xf32>
    %467 = vector.extract_strided_slice %454 {offsets = [0, 64], sizes = [2, 32], strides = [1, 1]} : vector<2x128xf32> to vector<2x32xf32>
    %468 = math.tanh %467 : vector<2x32xf32>
    %469 = vector.extract_strided_slice %454 {offsets = [0, 96], sizes = [2, 32], strides = [1, 1]} : vector<2x128xf32> to vector<2x32xf32>
    %470 = arith.negf %469 : vector<2x32xf32>
    %471 = math.exp %470 : vector<2x32xf32>
    %cst_81 = arith.constant 1.000000e+00 : f32
    %472 = vector.broadcast %cst_81 : f32 to vector<2x32xf32>
    %473 = arith.addf %472, %471 : vector<2x32xf32>
    %474 = arith.divf %472, %473 : vector<2x32xf32>
    %475 = arith.mulf %466, %422 : vector<2x32xf32>
    %476 = arith.mulf %460, %468 : vector<2x32xf32>
    %477 = arith.addf %475, %476 : vector<2x32xf32>
    %478 = math.tanh %477 : vector<2x32xf32>
    %479 = arith.mulf %474, %478 : vector<2x32xf32>
    %480 = tpu.concatenate %451, %479 in 1 : vector<2x32xf32>, vector<2x32xf32> -> vector<2x64xf32>
    %cst_82 = arith.constant dense<0.000000e+00> : vector<2x128xf32>
    %481 = tpu.matmul %480, %6, %cst_82 {dimension_numbers = #tpu.dot_dimension_numbers<[1], [0], [0], [1], [0, 0, 1, 1], [], []>} : vector<2x64xf32>, vector<64x128xf32>, vector<2x128xf32> -> vector<2x128xf32>
    %482 = arith.addf %481, %9 : vector<2x128xf32>
    %483 = vector.extract_strided_slice %482 {offsets = [0, 0], sizes = [2, 32], strides = [1, 1]} : vector<2x128xf32> to vector<2x32xf32>
    %484 = arith.negf %483 : vector<2x32xf32>
    %485 = math.exp %484 : vector<2x32xf32>
    %cst_83 = arith.constant 1.000000e+00 : f32
    %486 = vector.broadcast %cst_83 : f32 to vector<2x32xf32>
    %487 = arith.addf %486, %485 : vector<2x32xf32>
    %488 = arith.divf %486, %487 : vector<2x32xf32>
    %489 = vector.extract_strided_slice %482 {offsets = [0, 32], sizes = [2, 32], strides = [1, 1]} : vector<2x128xf32> to vector<2x32xf32>
    %490 = arith.negf %489 : vector<2x32xf32>
    %491 = math.exp %490 : vector<2x32xf32>
    %cst_84 = arith.constant 1.000000e+00 : f32
    %492 = vector.broadcast %cst_84 : f32 to vector<2x32xf32>
    %493 = arith.addf %492, %491 : vector<2x32xf32>
    %494 = arith.divf %492, %493 : vector<2x32xf32>
    %495 = vector.extract_strided_slice %482 {offsets = [0, 64], sizes = [2, 32], strides = [1, 1]} : vector<2x128xf32> to vector<2x32xf32>
    %496 = math.tanh %495 : vector<2x32xf32>
    %497 = vector.extract_strided_slice %482 {offsets = [0, 96], sizes = [2, 32], strides = [1, 1]} : vector<2x128xf32> to vector<2x32xf32>
    %498 = arith.negf %497 : vector<2x32xf32>
    %499 = math.exp %498 : vector<2x32xf32>
    %cst_85 = arith.constant 1.000000e+00 : f32
    %500 = vector.broadcast %cst_85 : f32 to vector<2x32xf32>
    %501 = arith.addf %500, %499 : vector<2x32xf32>
    %502 = arith.divf %500, %501 : vector<2x32xf32>
    %503 = arith.mulf %494, %477 : vector<2x32xf32>
    %504 = arith.mulf %488, %496 : vector<2x32xf32>
    %505 = arith.addf %503, %504 : vector<2x32xf32>
    %506 = math.tanh %505 : vector<2x32xf32>
    %507 = arith.mulf %502, %506 : vector<2x32xf32>
    %508 = vector.extract_strided_slice %149 {offsets = [0, 0], sizes = [1, 32], strides = [1, 1]} : vector<2x32xf32> to vector<1x32xf32>
    %509 = vector.extract_strided_slice %204 {offsets = [0, 0], sizes = [1, 32], strides = [1, 1]} : vector<2x32xf32> to vector<1x32xf32>
    %510 = vector.extract_strided_slice %259 {offsets = [0, 0], sizes = [1, 32], strides = [1, 1]} : vector<2x32xf32> to vector<1x32xf32>
    %511 = vector.extract_strided_slice %314 {offsets = [0, 0], sizes = [1, 32], strides = [1, 1]} : vector<2x32xf32> to vector<1x32xf32>
    %512 = vector.extract_strided_slice %369 {offsets = [0, 0], sizes = [1, 32], strides = [1, 1]} : vector<2x32xf32> to vector<1x32xf32>
    %513 = vector.extract_strided_slice %424 {offsets = [0, 0], sizes = [1, 32], strides = [1, 1]} : vector<2x32xf32> to vector<1x32xf32>
    %514 = vector.extract_strided_slice %479 {offsets = [0, 0], sizes = [1, 32], strides = [1, 1]} : vector<2x32xf32> to vector<1x32xf32>
    %515 = vector.extract_strided_slice %507 {offsets = [0, 0], sizes = [1, 32], strides = [1, 1]} : vector<2x32xf32> to vector<1x32xf32>
    %516 = vector.extract_strided_slice %149 {offsets = [1, 0], sizes = [1, 32], strides = [1, 1]} : vector<2x32xf32> to vector<1x32xf32>
    %517 = vector.extract_strided_slice %204 {offsets = [1, 0], sizes = [1, 32], strides = [1, 1]} : vector<2x32xf32> to vector<1x32xf32>
    %518 = vector.extract_strided_slice %259 {offsets = [1, 0], sizes = [1, 32], strides = [1, 1]} : vector<2x32xf32> to vector<1x32xf32>
    %519 = vector.extract_strided_slice %314 {offsets = [1, 0], sizes = [1, 32], strides = [1, 1]} : vector<2x32xf32> to vector<1x32xf32>
    %520 = vector.extract_strided_slice %369 {offsets = [1, 0], sizes = [1, 32], strides = [1, 1]} : vector<2x32xf32> to vector<1x32xf32>
    %521 = vector.extract_strided_slice %424 {offsets = [1, 0], sizes = [1, 32], strides = [1, 1]} : vector<2x32xf32> to vector<1x32xf32>
    %522 = vector.extract_strided_slice %479 {offsets = [1, 0], sizes = [1, 32], strides = [1, 1]} : vector<2x32xf32> to vector<1x32xf32>
    %523 = vector.extract_strided_slice %507 {offsets = [1, 0], sizes = [1, 32], strides = [1, 1]} : vector<2x32xf32> to vector<1x32xf32>
    %524 = tpu.concatenate %508, %509, %510, %511, %512, %513, %514, %515, %516, %517, %518, %519, %520, %521, %522, %523 in 0 : vector<1x32xf32>, vector<1x32xf32>, vector<1x32xf32>, vector<1x32xf32>, vector<1x32xf32>, vector<1x32xf32>, vector<1x32xf32>, vector<1x32xf32>, vector<1x32xf32>, vector<1x32xf32>, vector<1x32xf32>, vector<1x32xf32>, vector<1x32xf32>, vector<1x32xf32>, vector<1x32xf32>, vector<1x32xf32> -> vector<16x32xf32>
    %cst_86 = arith.constant dense<0.000000e+00> : vector<16xf32>
    %525 = vector.multi_reduction <add>, %524, %cst_86 [1] : vector<16x32xf32> to vector<16xf32>
    %526 = vector.shape_cast %525 : vector<16xf32> to vector<16x1xf32>
    %cst_87 = arith.constant 3.200000e+01 : f32
    %527 = vector.broadcast %cst_87 : f32 to vector<16x1xf32>
    %528 = arith.divf %526, %527 : vector<16x1xf32>
    %529 = vector.broadcast %528 : vector<16x1xf32> to vector<16x32xf32>
    %530 = arith.subf %524, %529 : vector<16x32xf32>
    %531 = arith.mulf %530, %530 : vector<16x32xf32>
    %cst_88 = arith.constant dense<0.000000e+00> : vector<16xf32>
    %532 = vector.multi_reduction <add>, %531, %cst_88 [1] : vector<16x32xf32> to vector<16xf32>
    %533 = vector.shape_cast %532 : vector<16xf32> to vector<16x1xf32>
    %cst_89 = arith.constant 3.200000e+01 : f32
    %534 = vector.broadcast %cst_89 : f32 to vector<16x1xf32>
    %535 = arith.divf %533, %534 : vector<16x1xf32>
    %536 = vector.broadcast %528 : vector<16x1xf32> to vector<16x32xf32>
    %537 = arith.subf %524, %536 : vector<16x32xf32>
    %cst_90 = arith.constant 9.99999974E-6 : f32
    %538 = vector.broadcast %cst_90 : f32 to vector<16x1xf32>
    %539 = arith.addf %535, %538 : vector<16x1xf32>
    %540 = math.rsqrt %539 : vector<16x1xf32>
    %541 = vector.broadcast %540 : vector<16x1xf32> to vector<16x32xf32>
    %542 = arith.mulf %537, %541 : vector<16x32xf32>
    %cst_91 = arith.constant dense<0.000000e+00> : vector<16x128xf32>
    %543 = tpu.matmul %542, %10, %cst_91 {dimension_numbers = #tpu.dot_dimension_numbers<[1], [0], [0], [1], [0, 0, 1, 1], [], []>} : vector<16x32xf32>, vector<32x128xf32>, vector<16x128xf32> -> vector<16x128xf32>
    %544 = vector.broadcast %11 : vector<1x128xf32> to vector<16x128xf32>
    %545 = arith.addf %543, %544 : vector<16x128xf32>
    %cst_92 = arith.constant dense<0xFF800000> : vector<16xf32>
    %546 = vector.multi_reduction <maximumf>, %545, %cst_92 [1] : vector<16x128xf32> to vector<16xf32>
    %547 = vector.shape_cast %546 : vector<16xf32> to vector<16x1xf32>
    %548 = vector.broadcast %547 : vector<16x1xf32> to vector<16x128xf32>
    %549 = arith.subf %545, %548 : vector<16x128xf32>
    %550 = math.exp %549 : vector<16x128xf32>
    %cst_93 = arith.constant dense<0.000000e+00> : vector<16xf32>
    %551 = vector.multi_reduction <add>, %550, %cst_93 [1] : vector<16x128xf32> to vector<16xf32>
    %552 = vector.shape_cast %551 : vector<16xf32> to vector<16x1xf32>
    %553 = vector.broadcast %552 : vector<16x1xf32> to vector<16x128xf32>
    %554 = arith.divf %550, %553 : vector<16x128xf32>
    %c0_94 = arith.constant 0 : index
    %c0_95 = arith.constant 0 : index
    %555 = vector.load %arg4[%c0_94, %c0_95] : memref<16x128xf32, #tpu.memory_space<vmem>>, vector<16x128xf32>
    tpu.vector_store %arg4[%c0_94, %c0_95], %554 {strides = array<i32>} : memref<16x128xf32, #tpu.memory_space<vmem>>, vector<16x128xf32>,
    return
  }
  func.func @transform_0(%arg0: i32, %arg1: memref<16xi32, #tpu.memory_space<smem>>) -> (i32, i32) {
    %c0_i32 = arith.constant 0 : i32
    %c0_i32_0 = arith.constant 0 : i32
    %c0_i32_1 = arith.constant 0 : i32
    return %c0_i32, %c0_i32_0 : i32, i32
  }
  func.func @transform_1(%arg0: i32, %arg1: memref<16xi32, #tpu.memory_space<smem>>) -> (i32, i32) {
    %c0_i32 = arith.constant 0 : i32
    %c0_i32_0 = arith.constant 0 : i32
    %c0_i32_1 = arith.constant 0 : i32
    return %c0_i32, %c0_i32_0 : i32, i32
  }
  func.func @transform_2(%arg0: i32, %arg1: memref<16xi32, #tpu.memory_space<smem>>) -> (i32, i32) {
    %c0_i32 = arith.constant 0 : i32
    %c0_i32_0 = arith.constant 0 : i32
    %c0_i32_1 = arith.constant 0 : i32
    return %c0_i32, %c0_i32_0 : i32, i32
  }
}

</mosaic_0001>

<llo_original>
// kernel: tpu_custom_call.1
$region0: #{tpu_custom_call.1}
  #allocation0 [shape = 'u32[]', space=smem, size = 0x4, offset = 0x4, fixed_abs, tag = 'smem constant byte address 0x4 - core index']
  #allocation1 [shape = 'u32[72,128]{1,0:T(1,128)}', space=vmem, size = 0x9000, scoped, tag = 'internal scratch']
  #allocation2 [shape = 's32[1]{0}', space=sflag, size = 0x4, scoped, tag = 'scoped memory for tpu_custom_call.1']
  #allocation3 [shape = 'u8[512]{0}', space=smem, size = 0x200, scoped, tag = 'prefetched SMEM operand 0']
  %s0 = inlined_call_operand.hbm [shape: s32[16], index: 0, kind: input, shape index: {}]
  %s1 = inlined_call_operand.hbm [shape: f32[8,32], index: 1, kind: input, shape index: {}]
  %s2 = inlined_call_operand.hbm [shape: f32[272,128], index: 2, kind: input, shape index: {}]
  %s3 = inlined_call_operand.hbm [shape: f32[16,128], index: 3, kind: output, shape index: {}]
  %s4 = sld [smem:[#allocation0]]
  $region26: #{tpu_custom_call.1} parent=0
    _
  %s6 = ssub.s32 1, %s4
  %s7 = scalar_select 0, %s6, %s4
  %s9 = sshll.u32 %s0, 4
  %s10 = int_to_ptr.hbm [resolvable:$true] %s9
  %12 = dma.hbm_to_smem %s10, 16, [#allocation3], [#allocation2]
  %14 = dma.done [#allocation2], 16
  %15 = sfence
  $region1: #{tpu_custom_call.1} parent=0
    #allocation4 [shape = 'u8[4096]{0}', space=vmem, size = 0x1000, scoped, tag = 'input window, operand 1, single buffered']
    #allocation5 [shape = 's32[1]{0}', space=sflag, size = 0x4, scoped, tag = 'scoped memory for tpu_custom_call.1']
    #allocation6 [shape = 's32[1]{0}', space=sflag, size = 0x4, scoped, tag = 'scoped memory for tpu_custom_call.1']
    #allocation7 [shape = 'u8[139264]{0}', space=vmem, size = 0x22000, scoped, tag = 'input window, operand 2, single buffered']
    #allocation8 [shape = 's32[1]{0}', space=sflag, size = 0x4, scoped, tag = 'scoped memory for tpu_custom_call.1']
    #allocation9 [shape = 'u8[8192]{0}', space=vmem, size = 0x2000, scoped, tag = 'output window, operand 0, single buffered']
    %16 = vsyncpa [#allocation5], 0
    %17 = vsyncpa [#allocation8], 0
    %18 = vsyncpa [#allocation6], 0
    // Predicated region
    $region2: #{tpu_custom_call.1} parent=1 // pred_check
      _
    $region3: #{tpu_custom_call.1} parent=1 // pred_check_branch
      %20 = sbr.rel (0) target = $region5
    $region4: #{tpu_custom_call.1} parent=1 // pred_region
      %22 = vsyncadd [#allocation5], 0
      %s24 = sshll.u32 %s1, 4
      %s25 = int_to_ptr.hbm [resolvable:$true] %s24
      %s26 = sshll.u32 [#allocation4], 4
      %s27 = int_to_ptr.vmem [resolvable:$true] %s26
      %29 = dma.hbm_to_vmem [thread:$0]  %s25, 128, %s27, [#allocation5]
    $region5: #{tpu_custom_call.1} parent=1 // pred_fallthru
      _
    // Predicated region
    $region6: #{tpu_custom_call.1} parent=1 // pred_check
      _
    $region7: #{tpu_custom_call.1} parent=1 // pred_check_branch
      %31 = sbr.rel (0) target = $region9
    $region8: #{tpu_custom_call.1} parent=1 // pred_region
      %33 = vsyncadd [#allocation8], 0
      %s34 = sshll.u32 %s2, 4
      %s35 = int_to_ptr.hbm [resolvable:$true] %s34
      %s36 = sshll.u32 [#allocation7], 4
      %s37 = int_to_ptr.vmem [resolvable:$true] %s36
      %42 = dma.hbm_to_vmem [thread:$0]  %s35, 4352, %s37, [#allocation8], 128, 128, 8
    $region9: #{tpu_custom_call.1} parent=1 // pred_fallthru
      _
    // Predicated region
    $region10: #{tpu_custom_call.1} parent=1 // pred_check
      _
    $region11: #{tpu_custom_call.1} parent=1 // pred_check_branch
      %44 = sbr.rel (0) target = $region13
    $region12: #{tpu_custom_call.1} parent=1 // pred_region
      %46 = dma.done [#allocation5], 128
    $region13: #{tpu_custom_call.1} parent=1 // pred_fallthru
      _
    // Predicated region
    $region14: #{tpu_custom_call.1} parent=1 // pred_check
      _
    $region15: #{tpu_custom_call.1} parent=1 // pred_check_branch
      %48 = sbr.rel (0) target = $region17
    $region16: #{tpu_custom_call.1} parent=1 // pred_region
      %50 = dma.done [#allocation8], 4352
    $region17: #{tpu_custom_call.1} parent=1 // pred_fallthru
      _
    %v51 = vld [vmem:[#allocation4] sm:$0xff]
    %v52 = vld [vmem:[#allocation7 + $0x80] sm:$0xff]
    %v53 = vld [vmem:[#allocation7 + $0x88] sm:$0xff]
    %v54 = vld [vmem:[#allocation7 + $0x90] sm:$0xff]
    %v55 = vld [vmem:[#allocation7 + $0x98] sm:$0xff]
    %v56 = vld [vmem:[#allocation7 + $0xa0] sm:$0xff]
    %v57 = vld [vmem:[#allocation7 + $0xa8] sm:$0xff]
    %v58 = vld [vmem:[#allocation7 + $0xb0] sm:$0xff]
    %v59 = vld [vmem:[#allocation7 + $0xb8] sm:$0xff]
    %v60 = vld [vmem:[#allocation7 + $0xc0] sm:$0xff]
    %v61 = vld [vmem:[#allocation7 + $0xc8] sm:$0xff]
    %v62 = vld [vmem:[#allocation7 + $0xd0] sm:$0xff]
    %v63 = vld [vmem:[#allocation7 + $0xd8] sm:$0xff]
    %v64 = vld [vmem:[#allocation7 + $0xe0] sm:$0x1]
    %v65 = vperm.slane %v64, 0
    %v66 = vld [vmem:[#allocation7 + $0xe8] sm:$0xff]
    %v67 = vld [vmem:[#allocation7 + $0xf0] sm:$0xff]
    %v68 = vld [vmem:[#allocation7 + $0xf8] sm:$0xff]
    %v69 = vld [vmem:[#allocation7 + $0x100] sm:$0xff]
    %v70 = vld [vmem:[#allocation7 + $0x108] sm:$0x1]
    %s71 = sld [smem:[#allocation3]]
    %s72 = scalar_lea.vmem [#allocation7], %s71
    %v73 = vld [vmem:[%s72] sm:$0x1]
    %s74 = sld [smem:[#allocation3 + $0x1]]
    %s75 = scalar_lea.vmem [#allocation7], %s74
    %v76 = vld [vmem:[%s75] sm:$0x1]
    %v78 = vrot.slane %v76, 7
    %vm80 = vcmask 1040384
    %v81 = vsel %vm80, %v73, %v78
    %s82 = sld [smem:[#allocation3 + $0x2]]
    %s83 = scalar_lea.vmem [#allocation7], %s82
    %v84 = vld [vmem:[%s83] sm:$0x1]
    %s85 = sld [smem:[#allocation3 + $0x3]]
    %s86 = scalar_lea.vmem [#allocation7], %s85
    %v87 = vld [vmem:[%s86] sm:$0x1]
    %v89 = vrot.slane %v87, 7
    %v91 = vsel %vm80, %v84, %v89
    %s92 = sld [smem:[#allocation3 + $0x4]]
    %s93 = scalar_lea.vmem [#allocation7], %s92
    %v94 = vld [vmem:[%s93] sm:$0x1]
    %s95 = sld [smem:[#allocation3 + $0x5]]
    %s96 = scalar_lea.vmem [#allocation7], %s95
    %v97 = vld [vmem:[%s96] sm:$0x1]
    %v99 = vrot.slane %v97, 7
    %v101 = vsel %vm80, %v94, %v99
    %s102 = sld [smem:[#allocation3 + $0x6]]
    %s103 = scalar_lea.vmem [#allocation7], %s102
    %v104 = vld [vmem:[%s103] sm:$0x1]
    %s105 = sld [smem:[#allocation3 + $0x7]]
    %s106 = scalar_lea.vmem [#allocation7], %s105
    %v107 = vld [vmem:[%s106] sm:$0x1]
    %v109 = vrot.slane %v107, 7
    %v111 = vsel %vm80, %v104, %v109
    %s112 = sld [smem:[#allocation3 + $0x8]]
    %s113 = scalar_lea.vmem [#allocation7], %s112
    %v114 = vld [vmem:[%s113] sm:$0x1]
    %s115 = sld [smem:[#allocation3 + $0x9]]
    %s116 = scalar_lea.vmem [#allocation7], %s115
    %v117 = vld [vmem:[%s116] sm:$0x1]
    %v119 = vrot.slane %v117, 7
    %v121 = vsel %vm80, %v114, %v119
    %s122 = sld [smem:[#allocation3 + $0xa]]
    %s123 = scalar_lea.vmem [#allocation7], %s122
    %v124 = vld [vmem:[%s123] sm:$0x1]
    %s125 = sld [smem:[#allocation3 + $0xb]]
    %s126 = scalar_lea.vmem [#allocation7], %s125
    %v127 = vld [vmem:[%s126] sm:$0x1]
    %v129 = vrot.slane %v127, 7
    %v131 = vsel %vm80, %v124, %v129
    %s132 = sld [smem:[#allocation3 + $0xc]]
    %s133 = scalar_lea.vmem [#allocation7], %s132
    %v134 = vld [vmem:[%s133] sm:$0x1]
    %s135 = sld [smem:[#allocation3 + $0xd]]
    %s136 = scalar_lea.vmem [#allocation7], %s135
    %v137 = vld [vmem:[%s136] sm:$0x1]
    %v139 = vrot.slane %v137, 7
    %v141 = vsel %vm80, %v134, %v139
    %s142 = sld [smem:[#allocation3 + $0xe]]
    %s143 = scalar_lea.vmem [#allocation7], %s142
    %v144 = vld [vmem:[%s143] sm:$0x1]
    %s145 = sld [smem:[#allocation3 + $0xf]]
    %s146 = scalar_lea.vmem [#allocation7], %s145
    %v147 = vld [vmem:[%s146] sm:$0x1]
    %v149 = vrot.slane %v147, 7
    %v151 = vsel %vm80, %v144, %v149
    %vm152 = vcmask 261120
    %v154 = vsel %vm152, %v51, 0
    %156 = vmatpush.msra.mxu0 0.0
    %157 = vmatpush.msra.mxu0 0.0
    %158 = vmatpush.msra.mxu0 0.0
    %159 = vmatpush.msra.mxu0 0.0
    %160 = vmatpush.msra.mxu0 0.0
    %161 = vmatpush.msra.mxu0 0.0
    %162 = vmatpush.msra.mxu0 0.0
    %163 = vmatpush.msra.mxu0 0.0
    %164 = vmatpush.msra.mxu0 0.0
    %165 = vmatpush.msra.mxu0 0.0
    %166 = vmatpush.msra.mxu0 0.0
    %167 = vmatpush.msra.mxu0 0.0
    %168 = vmatpush.msra.mxu0 %v55
    %169 = vmatpush.msra.mxu0 %v54
    %170 = vmatpush.msra.mxu0 %v53
    %171 = vmatpush.msra.mxu0 %v52
    %172 = vmatmul.f32.gmra.mxu0 %v154
    %v173 = vpop.f32.mrf.mxu0
    %v174 = vadd.f32 0.0, %v173
    %175 = vdwg.mxu0
    %v176 = vadd.f32 %v81, %v174
    %v177 = vxor.u32 %v176, 2147483648
    %v178 = vmul.f32 %v177, 1.442695
    %v179 = vpow.pop %v178
    %v180 = vadd.f32 %v179, 1.0
    %v181 = vrcp.pop %v180
    %v182 = vmul.f32 %v180, %v181
    %v183 = vsub.f32 1.0, %v182
    %v184 = vmul.f32 %v181, %v183
    %v185 = vadd.f32 %v181, %v184
    %vm186 = vweird.f32 %v180
    %vm187 = vweird.f32 %v181
    %vm188 = vmor %vm186, %vm187
    %v189 = vsel %vm188, %v181, %v185
    %v190 = vand.u32 2147483647, %v180
    %vm191 = vcmp.eq.f32.partialorder %v190, 8.507059e+37
    %v192 = vand.u32 %v180, 2147483648
    %v193 = vor.u32 1.1754944e-38, %v192
    %v194 = vsel %vm191, %v193, %v189
    %v195 = vmul.f32 1.0, %v194
    %v196 = vtanh.pop %v176
    %v197 = vrot.slane %v51, 4
    %198 = vrot.lane.b32.xlu0 %v197, 32
    %v199 = vpop.permute.xlu0 %198
    %v201 = vmul.f32 %v195, %v199
    %203 = vrot.lane.b32.xlu0 %v196, 64
    %v204 = vpop.permute.xlu0 %203
    %v206 = vmul.f32 %v195, %v204
    %208 = vrot.lane.b32.xlu0 %v206, 32
    %v209 = vpop.permute.xlu0 %208
    %v211 = vadd.f32 %v201, %v209
    %v212 = vtanh.pop %v211
    %214 = vrot.lane.b32.xlu0 %v212, 64
    %v215 = vpop.permute.xlu0 %214
    %v217 = vmul.f32 %v195, %v215
    %219 = vrot.lane.b32.xlu0 %v217, 32
    %v220 = vpop.permute.xlu0 %219
    %v221 = vsel %vm152, %v220, 0
    %223 = vmatpush.msra.mxu0 0.0
    %224 = vmatpush.msra.mxu0 0.0
    %225 = vmatpush.msra.mxu0 0.0
    %226 = vmatpush.msra.mxu0 0.0
    %227 = vmatpush.msra.mxu0 0.0
    %228 = vmatpush.msra.mxu0 0.0
    %229 = vmatpush.msra.mxu0 0.0
    %230 = vmatpush.msra.mxu0 0.0
    %231 = vmatpush.msra.mxu0 0.0
    %232 = vmatpush.msra.mxu0 0.0
    %233 = vmatpush.msra.mxu0 0.0
    %234 = vmatpush.msra.mxu0 0.0
    %235 = vmatpush.msra.mxu0 %v55
    %236 = vmatpush.msra.mxu0 %v54
    %237 = vmatpush.msra.mxu0 %v53
    %238 = vmatpush.msra.mxu0 %v52
    %239 = vmatmul.f32.gmra.mxu0 %v221
    %v240 = vpop.f32.mrf.mxu0
    %v241 = vadd.f32 0.0, %v240
    %242 = vdwg.mxu0
    %v243 = vadd.f32 %v91, %v241
    %v244 = vxor.u32 %v243, 2147483648
    %v245 = vmul.f32 %v244, 1.442695
    %v246 = vpow.pop %v245
    %v247 = vadd.f32 %v246, 1.0
    %v248 = vrcp.pop %v247
    %v249 = vmul.f32 %v247, %v248
    %v250 = vsub.f32 1.0, %v249
    %v251 = vmul.f32 %v248, %v250
    %v252 = vadd.f32 %v248, %v251
    %vm253 = vweird.f32 %v247
    %vm254 = vweird.f32 %v248
    %vm255 = vmor %vm253, %vm254
    %v256 = vsel %vm255, %v248, %v252
    %v257 = vand.u32 2147483647, %v247
    %vm258 = vcmp.eq.f32.partialorder %v257, 8.507059e+37
    %v259 = vand.u32 %v247, 2147483648
    %v260 = vor.u32 1.1754944e-38, %v259
    %v261 = vsel %vm258, %v260, %v256
    %v262 = vmul.f32 1.0, %v261
    %v263 = vtanh.pop %v243
    %v264 = vmul.f32 %v262, %v211
    %266 = vrot.lane.b32.xlu0 %v263, 64
    %v267 = vpop.permute.xlu0 %266
    %v269 = vmul.f32 %v262, %v267
    %271 = vrot.lane.b32.xlu0 %v269, 32
    %v272 = vpop.permute.xlu0 %271
    %v274 = vadd.f32 %v264, %v272
    %v275 = vtanh.pop %v274
    %277 = vrot.lane.b32.xlu0 %v275, 64
    %v278 = vpop.permute.xlu0 %277
    %v280 = vmul.f32 %v262, %v278
    %v282 = vrot.slane %v51, 2
    %283 = vrot.lane.b32.xlu0 %v282, 32
    %v284 = vpop.permute.xlu0 %283
    %v286 = vsel %vm152, %v220, %v284
    %vm287 = vcmask 523264
    %v289 = vsel %vm287, %v286, 0
    %291 = vmatpush.msra.mxu0 0.0
    %292 = vmatpush.msra.mxu0 0.0
    %293 = vmatpush.msra.mxu0 0.0
    %294 = vmatpush.msra.mxu0 0.0
    %295 = vmatpush.msra.mxu0 0.0
    %296 = vmatpush.msra.mxu0 0.0
    %297 = vmatpush.msra.mxu0 0.0
    %298 = vmatpush.msra.mxu0 0.0
    %299 = vmatpush.msra.mxu0 %v63
    %300 = vmatpush.msra.mxu0 %v62
    %301 = vmatpush.msra.mxu0 %v61
    %302 = vmatpush.msra.mxu0 %v60
    %303 = vmatpush.msra.mxu0 %v59
    %304 = vmatpush.msra.mxu0 %v58
    %305 = vmatpush.msra.mxu0 %v57
    %306 = vmatpush.msra.mxu0 %v56
    %307 = vmatmul.f32.gmra.mxu0 %v289
    %v308 = vpop.f32.mrf.mxu0
    %v309 = vadd.f32 %v65, %v308
    %310 = vdwg.mxu0
    %v311 = vxor.u32 %v309, 2147483648
    %v312 = vmul.f32 %v311, 1.442695
    %v313 = vpow.pop %v312
    %v314 = vadd.f32 %v313, 1.0
    %v315 = vrcp.pop %v314
    %v316 = vmul.f32 %v314, %v315
    %v317 = vsub.f32 1.0, %v316
    %v318 = vmul.f32 %v315, %v317
    %v319 = vadd.f32 %v315, %v318
    %vm320 = vweird.f32 %v314
    %vm321 = vweird.f32 %v315
    %vm322 = vmor %vm320, %vm321
    %v323 = vsel %vm322, %v315, %v319
    %v324 = vand.u32 2147483647, %v314
    %vm325 = vcmp.eq.f32.partialorder %v324, 8.507059e+37
    %v326 = vand.u32 %v314, 2147483648
    %v327 = vor.u32 1.1754944e-38, %v326
    %v328 = vsel %vm325, %v327, %v323
    %v329 = vmul.f32 1.0, %v328
    %v330 = vtanh.pop %v309
    %v331 = vrot.slane %v51, 6
    %332 = vrot.lane.b32.xlu0 %v331, 32
    %v333 = vpop.permute.xlu0 %332
    %v335 = vmul.f32 %v329, %v333
    %337 = vrot.lane.b32.xlu0 %v330, 64
    %v338 = vpop.permute.xlu0 %337
    %v340 = vmul.f32 %v329, %v338
    %342 = vrot.lane.b32.xlu0 %v340, 32
    %v343 = vpop.permute.xlu0 %342
    %v345 = vadd.f32 %v335, %v343
    %v346 = vtanh.pop %v345
    %348 = vrot.lane.b32.xlu0 %v346, 64
    %v349 = vpop.permute.xlu0 %348
    %v351 = vmul.f32 %v329, %v349
    %353 = vrot.lane.b32.xlu0 %v280, 32
    %v354 = vpop.permute.xlu0 %353
    %v355 = vsel %vm152, %v354, 0
    %357 = vmatpush.msra.mxu0 0.0
    %358 = vmatpush.msra.mxu0 0.0
    %359 = vmatpush.msra.mxu0 0.0
    %360 = vmatpush.msra.mxu0 0.0
    %361 = vmatpush.msra.mxu0 0.0
    %362 = vmatpush.msra.mxu0 0.0
    %363 = vmatpush.msra.mxu0 0.0
    %364 = vmatpush.msra.mxu0 0.0
    %365 = vmatpush.msra.mxu0 0.0
    %366 = vmatpush.msra.mxu0 0.0
    %367 = vmatpush.msra.mxu0 0.0
    %368 = vmatpush.msra.mxu0 0.0
    %369 = vmatpush.msra.mxu0 %v55
    %370 = vmatpush.msra.mxu0 %v54
    %371 = vmatpush.msra.mxu0 %v53
    %372 = vmatpush.msra.mxu0 %v52
    %373 = vmatmul.f32.gmra.mxu0 %v355
    %v374 = vpop.f32.mrf.mxu0
    %v375 = vadd.f32 0.0, %v374
    %376 = vdwg.mxu0
    %v377 = vadd.f32 %v101, %v375
    %v378 = vxor.u32 %v377, 2147483648
    %v379 = vmul.f32 %v378, 1.442695
    %v380 = vpow.pop %v379
    %v381 = vadd.f32 %v380, 1.0
    %v382 = vrcp.pop %v381
    %v383 = vmul.f32 %v381, %v382
    %v384 = vsub.f32 1.0, %v383
    %v385 = vmul.f32 %v382, %v384
    %v386 = vadd.f32 %v382, %v385
    %vm387 = vweird.f32 %v381
    %vm388 = vweird.f32 %v382
    %vm389 = vmor %vm387, %vm388
    %v390 = vsel %vm389, %v382, %v386
    %v391 = vand.u32 2147483647, %v381
    %vm392 = vcmp.eq.f32.partialorder %v391, 8.507059e+37
    %v393 = vand.u32 %v381, 2147483648
    %v394 = vor.u32 1.1754944e-38, %v393
    %v395 = vsel %vm392, %v394, %v390
    %v396 = vmul.f32 1.0, %v395
    %v397 = vtanh.pop %v377
    %v398 = vmul.f32 %v396, %v274
    %400 = vrot.lane.b32.xlu0 %v397, 64
    %v401 = vpop.permute.xlu0 %400
    %v403 = vmul.f32 %v396, %v401
    %405 = vrot.lane.b32.xlu0 %v403, 32
    %v406 = vpop.permute.xlu0 %405
    %v408 = vadd.f32 %v398, %v406
    %v409 = vtanh.pop %v408
    %411 = vrot.lane.b32.xlu0 %v409, 64
    %v412 = vpop.permute.xlu0 %411
    %v414 = vmul.f32 %v396, %v412
    %417 = vrot.lane.b32.xlu0 %v351, 64
    %v418 = vpop.permute.xlu0 %417
    %v420 = vsel %vm152, %v354, %v418
    %v422 = vsel %vm287, %v420, 0
    %424 = vmatpush.msra.mxu0 0.0
    %425 = vmatpush.msra.mxu0 0.0
    %426 = vmatpush.msra.mxu0 0.0
    %427 = vmatpush.msra.mxu0 0.0
    %428 = vmatpush.msra.mxu0 0.0
    %429 = vmatpush.msra.mxu0 0.0
    %430 = vmatpush.msra.mxu0 0.0
    %431 = vmatpush.msra.mxu0 0.0
    %432 = vmatpush.msra.mxu0 %v63
    %433 = vmatpush.msra.mxu0 %v62
    %434 = vmatpush.msra.mxu0 %v61
    %435 = vmatpush.msra.mxu0 %v60
    %436 = vmatpush.msra.mxu0 %v59
    %437 = vmatpush.msra.mxu0 %v58
    %438 = vmatpush.msra.mxu0 %v57
    %439 = vmatpush.msra.mxu0 %v56
    %440 = vmatmul.f32.gmra.mxu0 %v422
    %v441 = vpop.f32.mrf.mxu0
    %v442 = vadd.f32 %v65, %v441
    %443 = vdwg.mxu0
    %v444 = vxor.u32 %v442, 2147483648
    %v445 = vmul.f32 %v444, 1.442695
    %v446 = vpow.pop %v445
    %v447 = vadd.f32 %v446, 1.0
    %v448 = vrcp.pop %v447
    %v449 = vmul.f32 %v447, %v448
    %v450 = vsub.f32 1.0, %v449
    %v451 = vmul.f32 %v448, %v450
    %v452 = vadd.f32 %v448, %v451
    %vm453 = vweird.f32 %v447
    %vm454 = vweird.f32 %v448
    %vm455 = vmor %vm453, %vm454
    %v456 = vsel %vm455, %v448, %v452
    %v457 = vand.u32 2147483647, %v447
    %vm458 = vcmp.eq.f32.partialorder %v457, 8.507059e+37
    %v459 = vand.u32 %v447, 2147483648
    %v460 = vor.u32 1.1754944e-38, %v459
    %v461 = vsel %vm458, %v460, %v456
    %v462 = vmul.f32 1.0, %v461
    %v463 = vtanh.pop %v442
    %v464 = vmul.f32 %v462, %v345
    %466 = vrot.lane.b32.xlu0 %v463, 64
    %v467 = vpop.permute.xlu0 %466
    %v469 = vmul.f32 %v462, %v467
    %471 = vrot.lane.b32.xlu0 %v469, 32
    %v472 = vpop.permute.xlu0 %471
    %v474 = vadd.f32 %v464, %v472
    %v475 = vtanh.pop %v474
    %477 = vrot.lane.b32.xlu0 %v475, 64
    %v478 = vpop.permute.xlu0 %477
    %v480 = vmul.f32 %v462, %v478
    %482 = vrot.lane.b32.xlu0 %v414, 32
    %v483 = vpop.permute.xlu0 %482
    %v484 = vsel %vm152, %v483, 0
    %486 = vmatpush.msra.mxu0 0.0
    %487 = vmatpush.msra.mxu0 0.0
    %488 = vmatpush.msra.mxu0 0.0
    %489 = vmatpush.msra.mxu0 0.0
    %490 = vmatpush.msra.mxu0 0.0
    %491 = vmatpush.msra.mxu0 0.0
    %492 = vmatpush.msra.mxu0 0.0
    %493 = vmatpush.msra.mxu0 0.0
    %494 = vmatpush.msra.mxu0 0.0
    %495 = vmatpush.msra.mxu0 0.0
    %496 = vmatpush.msra.mxu0 0.0
    %497 = vmatpush.msra.mxu0 0.0
    %498 = vmatpush.msra.mxu0 %v55
    %499 = vmatpush.msra.mxu0 %v54
    %500 = vmatpush.msra.mxu0 %v53
    %501 = vmatpush.msra.mxu0 %v52
    %502 = vmatmul.f32.gmra.mxu0 %v484
    %v503 = vpop.f32.mrf.mxu0
    %v504 = vadd.f32 0.0, %v503
    %505 = vdwg.mxu0
    %v506 = vadd.f32 %v111, %v504
    %v507 = vxor.u32 %v506, 2147483648
    %v508 = vmul.f32 %v507, 1.442695
    %v509 = vpow.pop %v508
    %v510 = vadd.f32 %v509, 1.0
    %v511 = vrcp.pop %v510
    %v512 = vmul.f32 %v510, %v511
    %v513 = vsub.f32 1.0, %v512
    %v514 = vmul.f32 %v511, %v513
    %v515 = vadd.f32 %v511, %v514
    %vm516 = vweird.f32 %v510
    %vm517 = vweird.f32 %v511
    %vm518 = vmor %vm516, %vm517
    %v519 = vsel %vm518, %v511, %v515
    %v520 = vand.u32 2147483647, %v510
    %vm521 = vcmp.eq.f32.partialorder %v520, 8.507059e+37
    %v522 = vand.u32 %v510, 2147483648
    %v523 = vor.u32 1.1754944e-38, %v522
    %v524 = vsel %vm521, %v523, %v519
    %v525 = vmul.f32 1.0, %v524
    %v526 = vtanh.pop %v506
    %v527 = vmul.f32 %v525, %v408
    %529 = vrot.lane.b32.xlu0 %v526, 64
    %v530 = vpop.permute.xlu0 %529
    %v532 = vmul.f32 %v525, %v530
    %534 = vrot.lane.b32.xlu0 %v532, 32
    %v535 = vpop.permute.xlu0 %534
    %v537 = vadd.f32 %v527, %v535
    %v538 = vtanh.pop %v537
    %540 = vrot.lane.b32.xlu0 %v538, 64
    %v541 = vpop.permute.xlu0 %540
    %v543 = vmul.f32 %v525, %v541
    %546 = vrot.lane.b32.xlu0 %v480, 64
    %v547 = vpop.permute.xlu0 %546
    %v549 = vsel %vm152, %v483, %v547
    %v551 = vsel %vm287, %v549, 0
    %553 = vmatpush.msra.mxu0 0.0
    %554 = vmatpush.msra.mxu0 0.0
    %555 = vmatpush.msra.mxu0 0.0
    %556 = vmatpush.msra.mxu0 0.0
    %557 = vmatpush.msra.mxu0 0.0
    %558 = vmatpush.msra.mxu0 0.0
    %559 = vmatpush.msra.mxu0 0.0
    %560 = vmatpush.msra.mxu0 0.0
    %561 = vmatpush.msra.mxu0 %v63
    %562 = vmatpush.msra.mxu0 %v62
    %563 = vmatpush.msra.mxu0 %v61
    %564 = vmatpush.msra.mxu0 %v60
    %565 = vmatpush.msra.mxu0 %v59
    %566 = vmatpush.msra.mxu0 %v58
    %567 = vmatpush.msra.mxu0 %v57
    %568 = vmatpush.msra.mxu0 %v56
    %569 = vmatmul.f32.gmra.mxu0 %v551
    %v570 = vpop.f32.mrf.mxu0
    %v571 = vadd.f32 %v65, %v570
    %572 = vdwg.mxu0
    %v573 = vxor.u32 %v571, 2147483648
    %v574 = vmul.f32 %v573, 1.442695
    %v575 = vpow.pop %v574
    %v576 = vadd.f32 %v575, 1.0
    %v577 = vrcp.pop %v576
    %v578 = vmul.f32 %v576, %v577
    %v579 = vsub.f32 1.0, %v578
    %v580 = vmul.f32 %v577, %v579
    %v581 = vadd.f32 %v577, %v580
    %vm582 = vweird.f32 %v576
    %vm583 = vweird.f32 %v577
    %vm584 = vmor %vm582, %vm583
    %v585 = vsel %vm584, %v577, %v581
    %v586 = vand.u32 2147483647, %v576
    %vm587 = vcmp.eq.f32.partialorder %v586, 8.507059e+37
    %v588 = vand.u32 %v576, 2147483648
    %v589 = vor.u32 1.1754944e-38, %v588
    %v590 = vsel %vm587, %v589, %v585
    %v591 = vmul.f32 1.0, %v590
    %v592 = vtanh.pop %v571
    %v593 = vmul.f32 %v591, %v474
    %595 = vrot.lane.b32.xlu0 %v592, 64
    %v596 = vpop.permute.xlu0 %595
    %v598 = vmul.f32 %v591, %v596
    %600 = vrot.lane.b32.xlu0 %v598, 32
    %v601 = vpop.permute.xlu0 %600
    %v603 = vadd.f32 %v593, %v601
    %v604 = vtanh.pop %v603
    %606 = vrot.lane.b32.xlu0 %v604, 64
    %v607 = vpop.permute.xlu0 %606
    %v609 = vmul.f32 %v591, %v607
    %611 = vrot.lane.b32.xlu0 %v543, 32
    %v612 = vpop.permute.xlu0 %611
    %v613 = vsel %vm152, %v612, 0
    %615 = vmatpush.msra.mxu0 0.0
    %616 = vmatpush.msra.mxu0 0.0
    %617 = vmatpush.msra.mxu0 0.0
    %618 = vmatpush.msra.mxu0 0.0
    %619 = vmatpush.msra.mxu0 0.0
    %620 = vmatpush.msra.mxu0 0.0
    %621 = vmatpush.msra.mxu0 0.0
    %622 = vmatpush.msra.mxu0 0.0
    %623 = vmatpush.msra.mxu0 0.0
    %624 = vmatpush.msra.mxu0 0.0
    %625 = vmatpush.msra.mxu0 0.0
    %626 = vmatpush.msra.mxu0 0.0
    %627 = vmatpush.msra.mxu0 %v55
    %628 = vmatpush.msra.mxu0 %v54
    %629 = vmatpush.msra.mxu0 %v53
    %630 = vmatpush.msra.mxu0 %v52
    %631 = vmatmul.f32.gmra.mxu0 %v613
    %v632 = vpop.f32.mrf.mxu0
    %v633 = vadd.f32 0.0, %v632
    %634 = vdwg.mxu0
    %v635 = vadd.f32 %v121, %v633
    %v636 = vxor.u32 %v635, 2147483648
    %v637 = vmul.f32 %v636, 1.442695
    %v638 = vpow.pop %v637
    %v639 = vadd.f32 %v638, 1.0
    %v640 = vrcp.pop %v639
    %v641 = vmul.f32 %v639, %v640
    %v642 = vsub.f32 1.0, %v641
    %v643 = vmul.f32 %v640, %v642
    %v644 = vadd.f32 %v640, %v643
    %vm645 = vweird.f32 %v639
    %vm646 = vweird.f32 %v640
    %vm647 = vmor %vm645, %vm646
    %v648 = vsel %vm647, %v640, %v644
    %v649 = vand.u32 2147483647, %v639
    %vm650 = vcmp.eq.f32.partialorder %v649, 8.507059e+37
    %v651 = vand.u32 %v639, 2147483648
    %v652 = vor.u32 1.1754944e-38, %v651
    %v653 = vsel %vm650, %v652, %v648
    %v654 = vmul.f32 1.0, %v653
    %v655 = vtanh.pop %v635
    %v656 = vmul.f32 %v654, %v537
    %658 = vrot.lane.b32.xlu0 %v655, 64
    %v659 = vpop.permute.xlu0 %658
    %v661 = vmul.f32 %v654, %v659
    %663 = vrot.lane.b32.xlu0 %v661, 32
    %v664 = vpop.permute.xlu0 %663
    %v666 = vadd.f32 %v656, %v664
    %v667 = vtanh.pop %v666
    %669 = vrot.lane.b32.xlu0 %v667, 64
    %v670 = vpop.permute.xlu0 %669
    %v672 = vmul.f32 %v654, %v670
    %675 = vrot.lane.b32.xlu0 %v609, 64
    %v676 = vpop.permute.xlu0 %675
    %v678 = vsel %vm152, %v612, %v676
    %v680 = vsel %vm287, %v678, 0
    %682 = vmatpush.msra.mxu0 0.0
    %683 = vmatpush.msra.mxu0 0.0
    %684 = vmatpush.msra.mxu0 0.0
    %685 = vmatpush.msra.mxu0 0.0
    %686 = vmatpush.msra.mxu0 0.0
    %687 = vmatpush.msra.mxu0 0.0
    %688 = vmatpush.msra.mxu0 0.0
    %689 = vmatpush.msra.mxu0 0.0
    %690 = vmatpush.msra.mxu0 %v63
    %691 = vmatpush.msra.mxu0 %v62
    %692 = vmatpush.msra.mxu0 %v61
    %693 = vmatpush.msra.mxu0 %v60
    %694 = vmatpush.msra.mxu0 %v59
    %695 = vmatpush.msra.mxu0 %v58
    %696 = vmatpush.msra.mxu0 %v57
    %697 = vmatpush.msra.mxu0 %v56
    %698 = vmatmul.f32.gmra.mxu0 %v680
    %v699 = vpop.f32.mrf.mxu0
    %v700 = vadd.f32 %v65, %v699
    %701 = vdwg.mxu0
    %v702 = vxor.u32 %v700, 2147483648
    %v703 = vmul.f32 %v702, 1.442695
    %v704 = vpow.pop %v703
    %v705 = vadd.f32 %v704, 1.0
    %v706 = vrcp.pop %v705
    %v707 = vmul.f32 %v705, %v706
    %v708 = vsub.f32 1.0, %v707
    %v709 = vmul.f32 %v706, %v708
    %v710 = vadd.f32 %v706, %v709
    %vm711 = vweird.f32 %v705
    %vm712 = vweird.f32 %v706
    %vm713 = vmor %vm711, %vm712
    %v714 = vsel %vm713, %v706, %v710
    %v715 = vand.u32 2147483647, %v705
    %vm716 = vcmp.eq.f32.partialorder %v715, 8.507059e+37
    %v717 = vand.u32 %v705, 2147483648
    %v718 = vor.u32 1.1754944e-38, %v717
    %v719 = vsel %vm716, %v718, %v714
    %v720 = vmul.f32 1.0, %v719
    %v721 = vtanh.pop %v700
    %v722 = vmul.f32 %v720, %v603
    %724 = vrot.lane.b32.xlu0 %v721, 64
    %v725 = vpop.permute.xlu0 %724
    %v727 = vmul.f32 %v720, %v725
    %729 = vrot.lane.b32.xlu0 %v727, 32
    %v730 = vpop.permute.xlu0 %729
    %v732 = vadd.f32 %v722, %v730
    %v733 = vtanh.pop %v732
    %735 = vrot.lane.b32.xlu0 %v733, 64
    %v736 = vpop.permute.xlu0 %735
    %v738 = vmul.f32 %v720, %v736
    %740 = vrot.lane.b32.xlu0 %v672, 32
    %v741 = vpop.permute.xlu0 %740
    %v742 = vsel %vm152, %v741, 0
    %744 = vmatpush.msra.mxu0 0.0
    %745 = vmatpush.msra.mxu0 0.0
    %746 = vmatpush.msra.mxu0 0.0
    %747 = vmatpush.msra.mxu0 0.0
    %748 = vmatpush.msra.mxu0 0.0
    %749 = vmatpush.msra.mxu0 0.0
    %750 = vmatpush.msra.mxu0 0.0
    %751 = vmatpush.msra.mxu0 0.0
    %752 = vmatpush.msra.mxu0 0.0
    %753 = vmatpush.msra.mxu0 0.0
    %754 = vmatpush.msra.mxu0 0.0
    %755 = vmatpush.msra.mxu0 0.0
    %756 = vmatpush.msra.mxu0 %v55
    %757 = vmatpush.msra.mxu0 %v54
    %758 = vmatpush.msra.mxu0 %v53
    %759 = vmatpush.msra.mxu0 %v52
    %760 = vmatmul.f32.gmra.mxu0 %v742
    %v761 = vpop.f32.mrf.mxu0
    %v762 = vadd.f32 0.0, %v761
    %763 = vdwg.mxu0
    %v764 = vadd.f32 %v131, %v762
    %v765 = vxor.u32 %v764, 2147483648
    %v766 = vmul.f32 %v765, 1.442695
    %v767 = vpow.pop %v766
    %v768 = vadd.f32 %v767, 1.0
    %v769 = vrcp.pop %v768
    %v770 = vmul.f32 %v768, %v769
    %v771 = vsub.f32 1.0, %v770
    %v772 = vmul.f32 %v769, %v771
    %v773 = vadd.f32 %v769, %v772
    %vm774 = vweird.f32 %v768
    %vm775 = vweird.f32 %v769
    %vm776 = vmor %vm774, %vm775
    %v777 = vsel %vm776, %v769, %v773
    %v778 = vand.u32 2147483647, %v768
    %vm779 = vcmp.eq.f32.partialorder %v778, 8.507059e+37
    %v780 = vand.u32 %v768, 2147483648
    %v781 = vor.u32 1.1754944e-38, %v780
    %v782 = vsel %vm779, %v781, %v777
    %v783 = vmul.f32 1.0, %v782
    %v784 = vtanh.pop %v764
    %v785 = vmul.f32 %v783, %v666
    %787 = vrot.lane.b32.xlu0 %v784, 64
    %v788 = vpop.permute.xlu0 %787
    %v790 = vmul.f32 %v783, %v788
    %792 = vrot.lane.b32.xlu0 %v790, 32
    %v793 = vpop.permute.xlu0 %792
    %v795 = vadd.f32 %v785, %v793
    %v796 = vtanh.pop %v795
    %798 = vrot.lane.b32.xlu0 %v796, 64
    %v799 = vpop.permute.xlu0 %798
    %v801 = vmul.f32 %v783, %v799
    %804 = vrot.lane.b32.xlu0 %v738, 64
    %v805 = vpop.permute.xlu0 %804
    %v807 = vsel %vm152, %v741, %v805
    %v809 = vsel %vm287, %v807, 0
    %811 = vmatpush.msra.mxu0 0.0
    %812 = vmatpush.msra.mxu0 0.0
    %813 = vmatpush.msra.mxu0 0.0
    %814 = vmatpush.msra.mxu0 0.0
    %815 = vmatpush.msra.mxu0 0.0
    %816 = vmatpush.msra.mxu0 0.0
    %817 = vmatpush.msra.mxu0 0.0
    %818 = vmatpush.msra.mxu0 0.0
    %819 = vmatpush.msra.mxu0 %v63
    %820 = vmatpush.msra.mxu0 %v62
    %821 = vmatpush.msra.mxu0 %v61
    %822 = vmatpush.msra.mxu0 %v60
    %823 = vmatpush.msra.mxu0 %v59
    %824 = vmatpush.msra.mxu0 %v58
    %825 = vmatpush.msra.mxu0 %v57
    %826 = vmatpush.msra.mxu0 %v56
    %827 = vmatmul.f32.gmra.mxu0 %v809
    %v828 = vpop.f32.mrf.mxu0
    %v829 = vadd.f32 %v65, %v828
    %830 = vdwg.mxu0
    %v831 = vxor.u32 %v829, 2147483648
    %v832 = vmul.f32 %v831, 1.442695
    %v833 = vpow.pop %v832
    %v834 = vadd.f32 %v833, 1.0
    %v835 = vrcp.pop %v834
    %v836 = vmul.f32 %v834, %v835
    %v837 = vsub.f32 1.0, %v836
    %v838 = vmul.f32 %v835, %v837
    %v839 = vadd.f32 %v835, %v838
    %vm840 = vweird.f32 %v834
    %vm841 = vweird.f32 %v835
    %vm842 = vmor %vm840, %vm841
    %v843 = vsel %vm842, %v835, %v839
    %v844 = vand.u32 2147483647, %v834
    %vm845 = vcmp.eq.f32.partialorder %v844, 8.507059e+37
    %v846 = vand.u32 %v834, 2147483648
    %v847 = vor.u32 1.1754944e-38, %v846
    %v848 = vsel %vm845, %v847, %v843
    %v849 = vmul.f32 1.0, %v848
    %v850 = vtanh.pop %v829
    %v851 = vmul.f32 %v849, %v732
    %853 = vrot.lane.b32.xlu0 %v850, 64
    %v854 = vpop.permute.xlu0 %853
    %v856 = vmul.f32 %v849, %v854
    %858 = vrot.lane.b32.xlu0 %v856, 32
    %v859 = vpop.permute.xlu0 %858
    %v861 = vadd.f32 %v851, %v859
    %v862 = vtanh.pop %v861
    %864 = vrot.lane.b32.xlu0 %v862, 64
    %v865 = vpop.permute.xlu0 %864
    %v867 = vmul.f32 %v849, %v865
    %869 = vrot.lane.b32.xlu0 %v801, 32
    %v870 = vpop.permute.xlu0 %869
    %v871 = vsel %vm152, %v870, 0
    %873 = vmatpush.msra.mxu0 0.0
    %874 = vmatpush.msra.mxu0 0.0
    %875 = vmatpush.msra.mxu0 0.0
    %876 = vmatpush.msra.mxu0 0.0
    %877 = vmatpush.msra.mxu0 0.0
    %878 = vmatpush.msra.mxu0 0.0
    %879 = vmatpush.msra.mxu0 0.0
    %880 = vmatpush.msra.mxu0 0.0
    %881 = vmatpush.msra.mxu0 0.0
    %882 = vmatpush.msra.mxu0 0.0
    %883 = vmatpush.msra.mxu0 0.0
    %884 = vmatpush.msra.mxu0 0.0
    %885 = vmatpush.msra.mxu0 %v55
    %886 = vmatpush.msra.mxu0 %v54
    %887 = vmatpush.msra.mxu0 %v53
    %888 = vmatpush.msra.mxu0 %v52
    %889 = vmatmul.f32.gmra.mxu0 %v871
    %v890 = vpop.f32.mrf.mxu0
    %v891 = vadd.f32 0.0, %v890
    %892 = vdwg.mxu0
    %v893 = vadd.f32 %v141, %v891
    %v894 = vxor.u32 %v893, 2147483648
    %v895 = vmul.f32 %v894, 1.442695
    %v896 = vpow.pop %v895
    %v897 = vadd.f32 %v896, 1.0
    %v898 = vrcp.pop %v897
    %v899 = vmul.f32 %v897, %v898
    %v900 = vsub.f32 1.0, %v899
    %v901 = vmul.f32 %v898, %v900
    %v902 = vadd.f32 %v898, %v901
    %vm903 = vweird.f32 %v897
    %vm904 = vweird.f32 %v898
    %vm905 = vmor %vm903, %vm904
    %v906 = vsel %vm905, %v898, %v902
    %v907 = vand.u32 2147483647, %v897
    %vm908 = vcmp.eq.f32.partialorder %v907, 8.507059e+37
    %v909 = vand.u32 %v897, 2147483648
    %v910 = vor.u32 1.1754944e-38, %v909
    %v911 = vsel %vm908, %v910, %v906
    %v912 = vmul.f32 1.0, %v911
    %v913 = vtanh.pop %v893
    %v914 = vmul.f32 %v912, %v795
    %916 = vrot.lane.b32.xlu0 %v913, 64
    %v917 = vpop.permute.xlu0 %916
    %v919 = vmul.f32 %v912, %v917
    %921 = vrot.lane.b32.xlu0 %v919, 32
    %v922 = vpop.permute.xlu0 %921
    %v924 = vadd.f32 %v914, %v922
    %v925 = vtanh.pop %v924
    %927 = vrot.lane.b32.xlu0 %v925, 64
    %v928 = vpop.permute.xlu0 %927
    %v930 = vmul.f32 %v912, %v928
    %933 = vrot.lane.b32.xlu0 %v867, 64
    %v934 = vpop.permute.xlu0 %933
    %v936 = vsel %vm152, %v870, %v934
    %v938 = vsel %vm287, %v936, 0
    %940 = vmatpush.msra.mxu0 0.0
    %941 = vmatpush.msra.mxu0 0.0
    %942 = vmatpush.msra.mxu0 0.0
    %943 = vmatpush.msra.mxu0 0.0
    %944 = vmatpush.msra.mxu0 0.0
    %945 = vmatpush.msra.mxu0 0.0
    %946 = vmatpush.msra.mxu0 0.0
    %947 = vmatpush.msra.mxu0 0.0
    %948 = vmatpush.msra.mxu0 %v63
    %949 = vmatpush.msra.mxu0 %v62
    %950 = vmatpush.msra.mxu0 %v61
    %951 = vmatpush.msra.mxu0 %v60
    %952 = vmatpush.msra.mxu0 %v59
    %953 = vmatpush.msra.mxu0 %v58
    %954 = vmatpush.msra.mxu0 %v57
    %955 = vmatpush.msra.mxu0 %v56
    %956 = vmatmul.f32.gmra.mxu0 %v938
    %v957 = vpop.f32.mrf.mxu0
    %v958 = vadd.f32 %v65, %v957
    %959 = vdwg.mxu0
    %v960 = vxor.u32 %v958, 2147483648
    %v961 = vmul.f32 %v960, 1.442695
    %v962 = vpow.pop %v961
    %v963 = vadd.f32 %v962, 1.0
    %v964 = vrcp.pop %v963
    %v965 = vmul.f32 %v963, %v964
    %v966 = vsub.f32 1.0, %v965
    %v967 = vmul.f32 %v964, %v966
    %v968 = vadd.f32 %v964, %v967
    %vm969 = vweird.f32 %v963
    %vm970 = vweird.f32 %v964
    %vm971 = vmor %vm969, %vm970
    %v972 = vsel %vm971, %v964, %v968
    %v973 = vand.u32 2147483647, %v963
    %vm974 = vcmp.eq.f32.partialorder %v973, 8.507059e+37
    %v975 = vand.u32 %v963, 2147483648
    %v976 = vor.u32 1.1754944e-38, %v975
    %v977 = vsel %vm974, %v976, %v972
    %v978 = vmul.f32 1.0, %v977
    %v979 = vtanh.pop %v958
    %v980 = vmul.f32 %v978, %v861
    %982 = vrot.lane.b32.xlu0 %v979, 64
    %v983 = vpop.permute.xlu0 %982
    %v985 = vmul.f32 %v978, %v983
    %987 = vrot.lane.b32.xlu0 %v985, 32
    %v988 = vpop.permute.xlu0 %987
    %v990 = vadd.f32 %v980, %v988
    %v991 = vtanh.pop %v990
    %993 = vrot.lane.b32.xlu0 %v991, 64
    %v994 = vpop.permute.xlu0 %993
    %v996 = vmul.f32 %v978, %v994
    %998 = vrot.lane.b32.xlu0 %v930, 32
    %v999 = vpop.permute.xlu0 %998
    %v1000 = vsel %vm152, %v999, 0
    %1002 = vmatpush.msra.mxu0 0.0
    %1003 = vmatpush.msra.mxu0 0.0
    %1004 = vmatpush.msra.mxu0 0.0
    %1005 = vmatpush.msra.mxu0 0.0
    %1006 = vmatpush.msra.mxu0 0.0
    %1007 = vmatpush.msra.mxu0 0.0
    %1008 = vmatpush.msra.mxu0 0.0
    %1009 = vmatpush.msra.mxu0 0.0
    %1010 = vmatpush.msra.mxu0 0.0
    %1011 = vmatpush.msra.mxu0 0.0
    %1012 = vmatpush.msra.mxu0 0.0
    %1013 = vmatpush.msra.mxu0 0.0
    %1014 = vmatpush.msra.mxu0 %v55
    %1015 = vmatpush.msra.mxu0 %v54
    %1016 = vmatpush.msra.mxu0 %v53
    %1017 = vmatpush.msra.mxu0 %v52
    %1018 = vmatmul.f32.gmra.mxu0 %v1000
    %v1019 = vpop.f32.mrf.mxu0
    %v1020 = vadd.f32 0.0, %v1019
    %1021 = vdwg.mxu0
    %v1022 = vadd.f32 %v151, %v1020
    %v1023 = vxor.u32 %v1022, 2147483648
    %v1024 = vmul.f32 %v1023, 1.442695
    %v1025 = vpow.pop %v1024
    %v1026 = vadd.f32 %v1025, 1.0
    %v1027 = vrcp.pop %v1026
    %v1028 = vmul.f32 %v1026, %v1027
    %v1029 = vsub.f32 1.0, %v1028
    %v1030 = vmul.f32 %v1027, %v1029
    %v1031 = vadd.f32 %v1027, %v1030
    %vm1032 = vweird.f32 %v1026
    %vm1033 = vweird.f32 %v1027
    %vm1034 = vmor %vm1032, %vm1033
    %v1035 = vsel %vm1034, %v1027, %v1031
    %v1036 = vand.u32 2147483647, %v1026
    %vm1037 = vcmp.eq.f32.partialorder %v1036, 8.507059e+37
    %v1038 = vand.u32 %v1026, 2147483648
    %v1039 = vor.u32 1.1754944e-38, %v1038
    %v1040 = vsel %vm1037, %v1039, %v1035
    %v1041 = vmul.f32 1.0, %v1040
    %v1042 = vtanh.pop %v1022
    %v1043 = vmul.f32 %v1041, %v924
    %1045 = vrot.lane.b32.xlu0 %v1042, 64
    %v1046 = vpop.permute.xlu0 %1045
    %v1048 = vmul.f32 %v1041, %v1046
    %1050 = vrot.lane.b32.xlu0 %v1048, 32
    %v1051 = vpop.permute.xlu0 %1050
    %v1053 = vadd.f32 %v1043, %v1051
    %v1054 = vtanh.pop %v1053
    %1056 = vrot.lane.b32.xlu0 %v1054, 64
    %v1057 = vpop.permute.xlu0 %1056
    %v1059 = vmul.f32 %v1041, %v1057
    %1062 = vrot.lane.b32.xlu0 %v996, 64
    %v1063 = vpop.permute.xlu0 %1062
    %v1065 = vsel %vm152, %v999, %v1063
    %v1067 = vsel %vm287, %v1065, 0
    %1069 = vmatpush.msra.mxu0 0.0
    %1070 = vmatpush.msra.mxu0 0.0
    %1071 = vmatpush.msra.mxu0 0.0
    %1072 = vmatpush.msra.mxu0 0.0
    %1073 = vmatpush.msra.mxu0 0.0
    %1074 = vmatpush.msra.mxu0 0.0
    %1075 = vmatpush.msra.mxu0 0.0
    %1076 = vmatpush.msra.mxu0 0.0
    %1077 = vmatpush.msra.mxu0 %v63
    %1078 = vmatpush.msra.mxu0 %v62
    %1079 = vmatpush.msra.mxu0 %v61
    %1080 = vmatpush.msra.mxu0 %v60
    %1081 = vmatpush.msra.mxu0 %v59
    %1082 = vmatpush.msra.mxu0 %v58
    %1083 = vmatpush.msra.mxu0 %v57
    %1084 = vmatpush.msra.mxu0 %v56
    %1085 = vmatmul.f32.gmra.mxu0 %v1067
    %v1086 = vpop.f32.mrf.mxu0
    %v1087 = vadd.f32 %v65, %v1086
    %1088 = vdwg.mxu0
    %v1089 = vxor.u32 %v1087, 2147483648
    %v1090 = vmul.f32 %v1089, 1.442695
    %v1091 = vpow.pop %v1090
    %v1092 = vadd.f32 %v1091, 1.0
    %v1093 = vrcp.pop %v1092
    %v1094 = vmul.f32 %v1092, %v1093
    %v1095 = vsub.f32 1.0, %v1094
    %v1096 = vmul.f32 %v1093, %v1095
    %v1097 = vadd.f32 %v1093, %v1096
    %vm1098 = vweird.f32 %v1092
    %vm1099 = vweird.f32 %v1093
    %vm1100 = vmor %vm1098, %vm1099
    %v1101 = vsel %vm1100, %v1093, %v1097
    %v1102 = vand.u32 2147483647, %v1092
    %vm1103 = vcmp.eq.f32.partialorder %v1102, 8.507059e+37
    %v1104 = vand.u32 %v1092, 2147483648
    %v1105 = vor.u32 1.1754944e-38, %v1104
    %v1106 = vsel %vm1103, %v1105, %v1101
    %v1107 = vmul.f32 1.0, %v1106
    %v1108 = vtanh.pop %v1087
    %v1109 = vmul.f32 %v1107, %v990
    %1111 = vrot.lane.b32.xlu0 %v1108, 64
    %v1112 = vpop.permute.xlu0 %1111
    %v1114 = vmul.f32 %v1107, %v1112
    %1116 = vrot.lane.b32.xlu0 %v1114, 32
    %v1117 = vpop.permute.xlu0 %1116
    %v1119 = vadd.f32 %v1109, %v1117
    %v1120 = vtanh.pop %v1119
    %1122 = vrot.lane.b32.xlu0 %v1120, 64
    %v1123 = vpop.permute.xlu0 %1122
    %v1125 = vmul.f32 %v1107, %v1123
    %1127 = vrot.lane.b32.xlu0 %v1059, 32
    %v1128 = vpop.permute.xlu0 %1127
    %1131 = vrot.lane.b32.xlu0 %v1125, 64
    %v1132 = vpop.permute.xlu0 %1131
    %v1134 = vsel %vm152, %v1128, %v1132
    %v1136 = vsel %vm287, %v1134, 0
    %1138 = vmatpush.msra.mxu0 0.0
    %1139 = vmatpush.msra.mxu0 0.0
    %1140 = vmatpush.msra.mxu0 0.0
    %1141 = vmatpush.msra.mxu0 0.0
    %1142 = vmatpush.msra.mxu0 0.0
    %1143 = vmatpush.msra.mxu0 0.0
    %1144 = vmatpush.msra.mxu0 0.0
    %1145 = vmatpush.msra.mxu0 0.0
    %1146 = vmatpush.msra.mxu0 %v63
    %1147 = vmatpush.msra.mxu0 %v62
    %1148 = vmatpush.msra.mxu0 %v61
    %1149 = vmatpush.msra.mxu0 %v60
    %1150 = vmatpush.msra.mxu0 %v59
    %1151 = vmatpush.msra.mxu0 %v58
    %1152 = vmatpush.msra.mxu0 %v57
    %1153 = vmatpush.msra.mxu0 %v56
    %1154 = vmatmul.f32.gmra.mxu0 %v1136
    %v1155 = vpop.f32.mrf.mxu0
    %v1156 = vadd.f32 %v65, %v1155
    %1157 = vdwg.mxu0
    %v1158 = vxor.u32 %v1156, 2147483648
    %v1159 = vmul.f32 %v1158, 1.442695
    %v1160 = vpow.pop %v1159
    %v1161 = vadd.f32 %v1160, 1.0
    %v1162 = vrcp.pop %v1161
    %v1163 = vmul.f32 %v1161, %v1162
    %v1164 = vsub.f32 1.0, %v1163
    %v1165 = vmul.f32 %v1162, %v1164
    %v1166 = vadd.f32 %v1162, %v1165
    %vm1167 = vweird.f32 %v1161
    %vm1168 = vweird.f32 %v1162
    %vm1169 = vmor %vm1167, %vm1168
    %v1170 = vsel %vm1169, %v1162, %v1166
    %v1171 = vand.u32 2147483647, %v1161
    %vm1172 = vcmp.eq.f32.partialorder %v1171, 8.507059e+37
    %v1173 = vand.u32 %v1161, 2147483648
    %v1174 = vor.u32 1.1754944e-38, %v1173
    %v1175 = vsel %vm1172, %v1174, %v1170
    %v1176 = vmul.f32 1.0, %v1175
    %v1177 = vtanh.pop %v1156
    %v1178 = vmul.f32 %v1176, %v1119
    %1180 = vrot.lane.b32.xlu0 %v1177, 64
    %v1181 = vpop.permute.xlu0 %1180
    %v1183 = vmul.f32 %v1176, %v1181
    %1185 = vrot.lane.b32.xlu0 %v1183, 32
    %v1186 = vpop.permute.xlu0 %1185
    %v1188 = vadd.f32 %v1178, %v1186
    %v1189 = vtanh.pop %v1188
    %1191 = vrot.lane.b32.xlu0 %v1189, 64
    %v1192 = vpop.permute.xlu0 %1191
    %v1194 = vmul.f32 %v1176, %v1192
    %v1195 = vrot.slane %v480, 7
    %v1197 = vrot.slane %v609, 6
    %v1199 = vrot.slane %v738, 5
    %v1201 = vrot.slane %v867, 4
    %v1203 = vrot.slane %v996, 3
    %v1205 = vrot.slane %v1125, 2
    %v1208 = vrot.slane %v1194, 1
    %v1210 = vrot.slane %v351, 1
    %v1212 = vrot.slane %v609, 7
    %v1214 = vrot.slane %v738, 6
    %v1216 = vrot.slane %v867, 5
    %v1218 = vrot.slane %v996, 4
    %v1220 = vrot.slane %v1125, 3
    %v1222 = vrot.slane %v1194, 2
    %v1224 = vsel %vm80, %v351, %v1195
    %vm1225 = vcmask 1041408
    %v1226 = vsel %vm1225, %v1224, %v1197
    %vm1227 = vcmask 1042432
    %v1228 = vsel %vm1227, %v1226, %v1199
    %vm1229 = vcmask 1043456
    %v1230 = vsel %vm1229, %v1228, %v1201
    %vm1231 = vcmask 1044480
    %v1232 = vsel %vm1231, %v1230, %v1203
    %vm1233 = vcmask 1045504
    %v1234 = vsel %vm1233, %v1232, %v1205
    %vm1235 = vcmask 1046528
    %v1236 = vsel %vm1235, %v1234, %v1208
    %v1237 = vsel %vm80, %v1210, %v480
    %v1238 = vsel %vm1225, %v1237, %v1212
    %v1239 = vsel %vm1227, %v1238, %v1214
    %v1240 = vsel %vm1229, %v1239, %v1216
    %v1241 = vsel %vm1231, %v1240, %v1218
    %v1242 = vsel %vm1233, %v1241, %v1220
    %v1243 = vsel %vm1235, %v1242, %v1222
    %1246 = vrot.lane.b32.xlu0 %v1236, 32
    %v1247 = vpop.permute.xlu0 %1246
    %1248 = vrot.lane.b32.xlu0 %v1243, 32
    %v1249 = vpop.permute.xlu0 %1248
    %v1252 = vsel %vm152, %v1247, 0.0
    %1253 = vadd.xlane.f32.xlu0 %v1252
    %v1254 = vpop.xlane.xlu0 %1253
    %v1255 = vsel %vm152, %v1249, 0.0
    %1256 = vadd.xlane.f32.xlu0 %v1255
    %v1257 = vpop.xlane.xlu0 %1256
    %v1258 = vrcp.pop 32.0
    %v1259 = vmul.f32 32.0, %v1258
    %v1260 = vsub.f32 1.0, %v1259
    %v1261 = vmul.f32 %v1258, %v1260
    %v1262 = vadd.f32 %v1258, %v1261
    %vm1263 = vweird.f32 %v1258
    %v1264 = vsel %vm1263, %v1258, %v1262
    %v1265 = vmul.f32 %v1254, %v1264
    %v1266 = vmul.f32 %v1257, %v1264
    %v1267 = vsub.f32 %v1236, %v1265
    %v1268 = vsub.f32 %v1243, %v1266
    %v1269 = vmul.f32 %v1267, %v1267
    %v1270 = vmul.f32 %v1268, %v1268
    %1273 = vrot.lane.b32.xlu0 %v1269, 32
    %v1274 = vpop.permute.xlu0 %1273
    %1275 = vrot.lane.b32.xlu0 %v1270, 32
    %v1276 = vpop.permute.xlu0 %1275
    %v1279 = vsel %vm152, %v1274, 0.0
    %1280 = vadd.xlane.f32.xlu0 %v1279
    %v1281 = vpop.xlane.xlu0 %1280
    %v1282 = vsel %vm152, %v1276, 0.0
    %1283 = vadd.xlane.f32.xlu0 %v1282
    %v1284 = vpop.xlane.xlu0 %1283
    %v1285 = vmul.f32 %v1281, %v1264
    %v1286 = vmul.f32 %v1284, %v1264
    %v1287 = vadd.f32 %v1285, 1e-05
    %v1288 = vadd.f32 %v1286, 1e-05
    %v1289 = vrsqrt.pop %v1287
    %v1290 = vmul.f32 %v1289, %v1287
    %v1291 = vmul.f32 %v1290, %v1289
    %v1292 = vmul.f32 0.5, %v1291
    %v1293 = vsub.f32 1.5, %v1292
    %v1294 = vmul.f32 %v1289, %v1293
    %vm1295 = vweird.f32 %v1287
    %vm1296 = vweird.f32 %v1289
    %vm1297 = vmor %vm1295, %vm1296
    %v1298 = vsel %vm1297, %v1289, %v1294
    %v1299 = vrsqrt.pop %v1288
    %v1300 = vmul.f32 %v1299, %v1288
    %v1301 = vmul.f32 %v1300, %v1299
    %v1302 = vmul.f32 0.5, %v1301
    %v1303 = vsub.f32 1.5, %v1302
    %v1304 = vmul.f32 %v1299, %v1303
    %vm1305 = vweird.f32 %v1288
    %vm1306 = vweird.f32 %v1299
    %vm1307 = vmor %vm1305, %vm1306
    %v1308 = vsel %vm1307, %v1299, %v1304
    %v1309 = vmul.f32 %v1267, %v1298
    %v1310 = vmul.f32 %v1268, %v1308
    %v1311 = vperm.slane %v70, 0
    %1314 = vrot.lane.b32.xlu0 %v1309, 32
    %v1315 = vpop.permute.xlu0 %1314
    %1316 = vrot.lane.b32.xlu0 %v1310, 32
    %v1317 = vpop.permute.xlu0 %1316
    %v1318 = vsel %vm152, %v1315, 0
    %v1320 = vsel %vm152, %v1317, 0
    %1322 = vmatpush.msra.mxu0 0.0
    %1323 = vmatpush.msra.mxu0 0.0
    %1324 = vmatpush.msra.mxu0 0.0
    %1325 = vmatpush.msra.mxu0 0.0
    %1326 = vmatpush.msra.mxu0 0.0
    %1327 = vmatpush.msra.mxu0 0.0
    %1328 = vmatpush.msra.mxu0 0.0
    %1329 = vmatpush.msra.mxu0 0.0
    %1330 = vmatpush.msra.mxu0 0.0
    %1331 = vmatpush.msra.mxu0 0.0
    %1332 = vmatpush.msra.mxu0 0.0
    %1333 = vmatpush.msra.mxu0 0.0
    %1334 = vmatpush.msra.mxu0 %v69
    %1335 = vmatpush.msra.mxu0 %v68
    %1336 = vmatpush.msra.mxu0 %v67
    %1337 = vmatpush.msra.mxu0 %v66
    %1338 = vmatmul.f32.gmra.mxu0 %v1318
    %v1339 = vpop.f32.mrf.mxu0
    %v1340 = vadd.f32 %v1311, %v1339
    %1341 = vmatmul.f32.gmra.mxu0 %v1320
    %v1342 = vpop.f32.mrf.mxu0
    %v1343 = vadd.f32 %v1311, %v1342
    %1344 = vdwg.mxu0
    %1345 = vmax.xlane.f32.xlu0 %v1340
    %v1346 = vpop.xlane.xlu0 %1345
    %1347 = vmax.xlane.f32.xlu0 %v1343
    %v1348 = vpop.xlane.xlu0 %1347
    %v1349 = vsub.f32 %v1340, %v1346
    %v1350 = vsub.f32 %v1343, %v1348
    %v1351 = vmul.f32 %v1349, 1.442695
    %v1352 = vpow.pop %v1351
    %v1353 = vmul.f32 %v1350, 1.442695
    %v1354 = vpow.pop %v1353
    %1355 = vadd.xlane.f32.xlu0 %v1352
    %v1356 = vpop.xlane.xlu0 %1355
    %1357 = vadd.xlane.f32.xlu0 %v1354
    %v1358 = vpop.xlane.xlu0 %1357
    %v1359 = vrcp.pop %v1356
    %v1360 = vmul.f32 %v1356, %v1359
    %v1361 = vsub.f32 1.0, %v1360
    %v1362 = vmul.f32 %v1359, %v1361
    %v1363 = vadd.f32 %v1359, %v1362
    %vm1364 = vweird.f32 %v1356
    %vm1365 = vweird.f32 %v1359
    %vm1366 = vmor %vm1364, %vm1365
    %v1367 = vsel %vm1366, %v1359, %v1363
    %v1368 = vand.u32 2147483647, %v1356
    %vm1369 = vcmp.eq.f32.partialorder %v1368, 8.507059e+37
    %v1370 = vand.u32 %v1356, 2147483648
    %v1371 = vor.u32 1.1754944e-38, %v1370
    %v1372 = vsel %vm1369, %v1371, %v1367
    %v1373 = vmul.f32 %v1352, %v1372
    %v1374 = vrcp.pop %v1358
    %v1375 = vmul.f32 %v1358, %v1374
    %v1376 = vsub.f32 1.0, %v1375
    %v1377 = vmul.f32 %v1374, %v1376
    %v1378 = vadd.f32 %v1374, %v1377
    %vm1379 = vweird.f32 %v1358
    %vm1380 = vweird.f32 %v1374
    %vm1381 = vmor %vm1379, %vm1380
    %v1382 = vsel %vm1381, %v1374, %v1378
    %v1383 = vand.u32 2147483647, %v1358
    %vm1384 = vcmp.eq.f32.partialorder %v1383, 8.507059e+37
    %v1385 = vand.u32 %v1358, 2147483648
    %v1386 = vor.u32 1.1754944e-38, %v1385
    %v1387 = vsel %vm1384, %v1386, %v1382
    %v1388 = vmul.f32 %v1354, %v1387
    %1389 = vst [vmem:[#allocation9] sm:$0xff] %v1373
    %1390 = vst [vmem:[#allocation9 + $0x8] sm:$0xff] %v1388
    // Predicated region
    $region18: #{tpu_custom_call.1} parent=1 // pred_check
      _
    $region19: #{tpu_custom_call.1} parent=1 // pred_check_branch
      %1392 = sbr.rel (0) target = $region21
    $region20: #{tpu_custom_call.1} parent=1 // pred_region
      %1394 = vsyncadd [#allocation6], 0
      %s1395 = sshll.u32 [#allocation9], 4
      %s1396 = int_to_ptr.vmem [resolvable:$true] %s1395
      %s1397 = sshll.u32 %s3, 4
      %s1398 = int_to_ptr.hbm [resolvable:$true] %s1397
      %1403 = dma.vmem_to_hbm [thread:$0]  %s1396, 256, %s1398, [#allocation6], 128, 128, 8
    $region21: #{tpu_custom_call.1} parent=1 // pred_fallthru
      _
    // Predicated region
    $region22: #{tpu_custom_call.1} parent=1 // pred_check
      _
    $region23: #{tpu_custom_call.1} parent=1 // pred_check_branch
      %1405 = sbr.rel (0) target = $region25
    $region24: #{tpu_custom_call.1} parent=1 // pred_region
      %1407 = dma.done [#allocation6], 256
    $region25: #{tpu_custom_call.1} parent=1 // pred_fallthru
      _
    %1408 = vsyncpa [#allocation5], 1
    %1409 = vsyncpa [#allocation8], 1
    %1410 = vsyncpa [#allocation6], 1

</llo_original>
